<compile_context>
chip_gen: v7x
topology: tpu7x:2x2x1
jax: 0.10.0
libtpu: 0.0.40
codegen_flags: <defaults>
</compile_context>

<pallas_src>
import functools
import math

import jax
import jax.numpy as jnp
from jax import lax
from jax.experimental import pallas as pl
from jax.experimental.pallas import tpu as pltpu


# ------------------------------- kernel ------------------------------------ #

def _global_mixing_kernel(x_ref, wqkv_ref, wout_ref, bout_ref, o_ref,
                          *, heads, dim_head):
    """Fused GlobalMixing forward for one batch element.

    x_ref   : [1, N, C]        pixels x input channels
    wqkv_ref: [C, 3*H*D]       1x1 conv weight (transposed), no bias
    wout_ref: [H*D, C]         1x1 conv weight (transposed)
    bout_ref: [1, C]           output conv bias
    o_ref   : [1, N, C]
    """
    x = x_ref[0].astype(jnp.float32)                       # [N, C]
    wqkv = wqkv_ref[...].astype(jnp.float32)               # [C, 3HD]
    wout = wout_ref[...].astype(jnp.float32)               # [HD, C]

    n = x.shape[0]
    c = x.shape[1]
    hd = heads * dim_head

    # qkv projection (1x1 conv == matmul over pixels).
    qkv = jnp.dot(x, wqkv, preferred_element_type=jnp.float32)   # [N, 3HD]

    # Accumulate the output projection head-by-head; avoids any channel concat.
    y = jnp.zeros((n, c), jnp.float32)
    for h in range(heads):
        q = qkv[:, 0 * hd + h * dim_head: 0 * hd + (h + 1) * dim_head]  # [N, D]
        k = qkv[:, 1 * hd + h * dim_head: 1 * hd + (h + 1) * dim_head]  # [N, D]
        v = qkv[:, 2 * hd + h * dim_head: 2 * hd + (h + 1) * dim_head]  # [N, D]

        # softmax over the spatial axis n (rows of the [N, D] block).
        k = k - jnp.max(k, axis=0, keepdims=True)
        k = jnp.exp(k)
        k = k / jnp.sum(k, axis=0, keepdims=True)

        # context[d, e] = sum_n k[n, d] * v[n, e]   -> k^T @ v
        context = lax.dot_general(
            k, v, (((0,), (0,)), ((), ())),
            preferred_element_type=jnp.float32)            # [D, D]

        # out[n, e] = sum_d q[n, d] * context[d, e]
        out_h = jnp.dot(q, context,
                        preferred_element_type=jnp.float32)  # [N, D]

        # partial output projection with this head's row-block of W_out.
        w_out_h = wout[h * dim_head:(h + 1) * dim_head, :]   # [D, C]
        y = y + jnp.dot(out_h, w_out_h,
                        preferred_element_type=jnp.float32)  # [N, C]

    y = y + bout_ref[...].astype(jnp.float32)               # broadcast [1, C]
    o_ref[0] = y.astype(o_ref.dtype)


# ------------------------------ wrapper ------------------------------------ #

def global_mixing_forward(params, x, *, heads, dim_head):
    """x: [B, C, H, W] (NCHW, like the PyTorch module).  Returns [B, C, H, W]."""
    b, c, hh, ww = x.shape
    n = hh * ww
    hd = heads * dim_head

    # NCHW -> [B, N, C]   (pixels as rows, channels on lanes)
    x_flat = jnp.transpose(x.reshape(b, c, n), (0, 2, 1)).astype(jnp.float32)

    w_qkv = params["w_qkv"]   # [C, 3*H*D]
    w_out = params["w_out"]   # [H*D, C]
    b_out = params["b_out"]   # [1, C]

    kernel = functools.partial(_global_mixing_kernel,
                               heads=heads, dim_head=dim_head)

    y_flat = pl.pallas_call(
        kernel,
        out_shape=jax.ShapeDtypeStruct((b, n, c), jnp.float32),
        grid=(b,),
        in_specs=[
            pl.BlockSpec((1, n, c), lambda i: (i, 0, 0)),
            pl.BlockSpec((c, 3 * hd), lambda i: (0, 0)),
            pl.BlockSpec((hd, c), lambda i: (0, 0)),
            pl.BlockSpec((1, c), lambda i: (0, 0)),
        ],
        out_specs=pl.BlockSpec((1, n, c), lambda i: (i, 0, 0)),
        compiler_params=pltpu.CompilerParams(
            dimension_semantics=("parallel",)),
    )(x_flat, w_qkv, w_out, b_out)

    # [B, N, C] -> NCHW
    return jnp.transpose(y_flat, (0, 2, 1)).reshape(b, c, hh, ww)


# --------------------------- parameter setup -------------------------------- #

def init_global_mixing_params(key, dim, heads, dim_head):
    """PyTorch Conv2d(k=1) default init; weights stored pre-transposed."""
    hd = heads * dim_head
    k1, k2, k3 = jax.random.split(key, 3)
    # to_qkv: Conv2d(dim, 3*hd, 1, bias=False): weight [3*hd, dim, 1, 1]
    bound_qkv = 1.0 / math.sqrt(dim)
    w_qkv_t = jax.random.uniform(k1, (3 * hd, dim), jnp.float32,
                                 -bound_qkv, bound_qkv)
    # to_out: Conv2d(hd, dim, 1): weight [dim, hd, 1, 1], bias [dim]
    bound_out = 1.0 / math.sqrt(hd)
    w_out_t = jax.random.uniform(k2, (dim, hd), jnp.float32,
                                 -bound_out, bound_out)
    b_out = jax.random.uniform(k3, (dim,), jnp.float32, -bound_out, bound_out)
    return {
        "w_qkv": w_qkv_t.T,                 # [dim, 3*hd]
        "w_out": w_out_t.T,                 # [hd, dim]
        "b_out": b_out.reshape(1, dim),     # [1, dim]
    }


# --------------------------- pure-JAX reference ------------------------------ #

def _reference_forward(params, x, *, heads, dim_head):
    b, c, hh, ww = x.shape
    n = hh * ww
    hd = heads * dim_head
    hp = lax.Precision.HIGHEST
    qkv = jnp.einsum("bchw,cf->bfhw", x, params["w_qkv"], precision=hp)
    qkv = qkv.reshape(b, 3, heads, dim_head, n)
    q, k, v = qkv[:, 0], qkv[:, 1], qkv[:, 2]                 # [b, H, D, n]
    k = jax.nn.softmax(k, axis=-1)
    context = jnp.einsum("bhdn,bhen->bhde", k, v, precision=hp)
    out = jnp.einsum("bhde,bhdn->bhen", context, q, precision=hp)
    out = out.reshape(b, hd, hh, ww)
    y = jnp.einsum("bfhw,fc->bchw", out, params["w_out"], precision=hp)
    return y + params["b_out"].reshape(1, c, 1, 1)


# --------------------------------- main -------------------------------------- #

if __name__ == "__main__":
    batch = 2
    dim = 16          # input / output channels
    heads = 4
    dim_head = 32     # keep small for the test (module default is 128)
    hh = ww = 8       # spatial -> n = 64 pixels

    key = jax.random.PRNGKey(0)
    k_params, k_x = jax.random.split(key)

    params = init_global_mixing_params(k_params, dim, heads, dim_head)
    x = jax.random.normal(k_x, (batch, dim, hh, ww), jnp.float32)

    out = global_mixing_forward(params, x, heads=heads, dim_head=dim_head)
    jax.block_until_ready(out)

    assert out.shape == (batch, dim, hh, ww), out.shape
    assert bool(jnp.all(jnp.isfinite(out)))

    ref = _reference_forward(params, x, heads=heads, dim_head=dim_head)
    assert bool(jnp.allclose(out, ref, rtol=1e-2, atol=1e-2)), (
        float(jnp.max(jnp.abs(out - ref))))

    print("KERNEL_OK")
</pallas_src>

<mosaic_0001>
module attributes {stable_mosaic.version = 11 : i64} {
  func.func @_global_mixing_kernel(%arg0: i32, %arg1: memref<1x64x16xf32, #tpu.memory_space<vmem>>, %arg2: memref<16x384xf32, #tpu.memory_space<vmem>>, %arg3: memref<128x16xf32, #tpu.memory_space<vmem>>, %arg4: memref<1x16xf32, #tpu.memory_space<vmem>>, %arg5: memref<1x64x16xf32, #tpu.memory_space<vmem>>) attributes {dimension_semantics = [#tpu.dimension_semantics<parallel>], iteration_bounds = array<i64: 2>, scalar_prefetch = 0 : i64, scratch_operands = 0 : i64, tpu.core_type = #tpu.core_type<tc>, window_params = [{transform_indices = @transform_0, window_bounds = array<i64: 1, 64, 16>}, {pipeline_mode = #tpu.pipeline_mode<synchronous>, transform_indices = @transform_1, window_bounds = array<i64: 16, 384>}, {pipeline_mode = #tpu.pipeline_mode<synchronous>, transform_indices = @transform_2, window_bounds = array<i64: 128, 16>}, {pipeline_mode = #tpu.pipeline_mode<synchronous>, transform_indices = @transform_3, window_bounds = array<i64: 1, 16>}, {transform_indices = @transform_4, window_bounds = array<i64: 1, 64, 16>}]} {
    %c0 = arith.constant 0 : index
    %c0_0 = arith.constant 0 : index
    %c0_1 = arith.constant 0 : index
    %0 = vector.load %arg1[%c0, %c0_0, %c0_1] : memref<1x64x16xf32, #tpu.memory_space<vmem>>, vector<1x64x16xf32>
    %1 = vector.shape_cast %0 : vector<1x64x16xf32> to vector<64x16xf32>
    %c0_2 = arith.constant 0 : index
    %c0_3 = arith.constant 0 : index
    %2 = vector.load %arg2[%c0_2, %c0_3] : memref<16x384xf32, #tpu.memory_space<vmem>>, vector<16x384xf32>
    %c0_4 = arith.constant 0 : index
    %c0_5 = arith.constant 0 : index
    %3 = vector.load %arg3[%c0_4, %c0_5] : memref<128x16xf32, #tpu.memory_space<vmem>>, vector<128x16xf32>
    %cst = arith.constant dense<0.000000e+00> : vector<64x384xf32>
    %4 = tpu.matmul %1, %2, %cst {dimension_numbers = #tpu.dot_dimension_numbers<[1], [0], [0], [1], [0, 0, 1, 1], [], []>} : vector<64x16xf32>, vector<16x384xf32>, vector<64x384xf32> -> vector<64x384xf32>
    %cst_6 = arith.constant 0.000000e+00 : f32
    %5 = vector.broadcast %cst_6 : f32 to vector<64x16xf32>
    %6 = vector.extract_strided_slice %4 {offsets = [0, 0], sizes = [64, 32], strides = [1, 1]} : vector<64x384xf32> to vector<64x32xf32>
    %7 = vector.extract_strided_slice %4 {offsets = [0, 128], sizes = [64, 32], strides = [1, 1]} : vector<64x384xf32> to vector<64x32xf32>
    %8 = vector.extract_strided_slice %4 {offsets = [0, 256], sizes = [64, 32], strides = [1, 1]} : vector<64x384xf32> to vector<64x32xf32>
    %cst_7 = arith.constant dense<0xFF800000> : vector<32xf32>
    %9 = vector.multi_reduction <maximumf>, %7, %cst_7 [0] : vector<64x32xf32> to vector<32xf32>
    %10 = vector.shape_cast %9 : vector<32xf32> to vector<1x32xf32>
    %11 = vector.broadcast %10 : vector<1x32xf32> to vector<64x32xf32>
    %12 = arith.subf %7, %11 : vector<64x32xf32>
    %13 = math.exp %12 : vector<64x32xf32>
    %cst_8 = arith.constant dense<0.000000e+00> : vector<32xf32>
    %14 = vector.multi_reduction <add>, %13, %cst_8 [0] : vector<64x32xf32> to vector<32xf32>
    %15 = vector.shape_cast %14 : vector<32xf32> to vector<1x32xf32>
    %16 = vector.broadcast %15 : vector<1x32xf32> to vector<64x32xf32>
    %17 = arith.divf %13, %16 : vector<64x32xf32>
    %cst_9 = arith.constant dense<0.000000e+00> : vector<32x32xf32>
    %18 = tpu.matmul %17, %8, %cst_9 {dimension_numbers = #tpu.dot_dimension_numbers<[0], [0], [1], [1], [0, 1, 1, 1], [], []>} : vector<64x32xf32>, vector<64x32xf32>, vector<32x32xf32> -> vector<32x32xf32>
    %cst_10 = arith.constant dense<0.000000e+00> : vector<64x32xf32>
    %19 = tpu.matmul %6, %18, %cst_10 {dimension_numbers = #tpu.dot_dimension_numbers<[1], [0], [0], [1], [0, 0, 1, 1], [], []>} : vector<64x32xf32>, vector<32x32xf32>, vector<64x32xf32> -> vector<64x32xf32>
    %20 = vector.extract_strided_slice %3 {offsets = [0, 0], sizes = [32, 16], strides = [1, 1]} : vector<128x16xf32> to vector<32x16xf32>
    %cst_11 = arith.constant dense<0.000000e+00> : vector<64x16xf32>
    %21 = tpu.matmul %19, %20, %cst_11 {dimension_numbers = #tpu.dot_dimension_numbers<[1], [0], [0], [1], [0, 0, 1, 1], [], []>} : vector<64x32xf32>, vector<32x16xf32>, vector<64x16xf32> -> vector<64x16xf32>
    %22 = arith.addf %5, %21 : vector<64x16xf32>
    %23 = vector.extract_strided_slice %4 {offsets = [0, 32], sizes = [64, 32], strides = [1, 1]} : vector<64x384xf32> to vector<64x32xf32>
    %24 = vector.extract_strided_slice %4 {offsets = [0, 160], sizes = [64, 32], strides = [1, 1]} : vector<64x384xf32> to vector<64x32xf32>
    %25 = vector.extract_strided_slice %4 {offsets = [0, 288], sizes = [64, 32], strides = [1, 1]} : vector<64x384xf32> to vector<64x32xf32>
    %cst_12 = arith.constant dense<0xFF800000> : vector<32xf32>
    %26 = vector.multi_reduction <maximumf>, %24, %cst_12 [0] : vector<64x32xf32> to vector<32xf32>
    %27 = vector.shape_cast %26 : vector<32xf32> to vector<1x32xf32>
    %28 = vector.broadcast %27 : vector<1x32xf32> to vector<64x32xf32>
    %29 = arith.subf %24, %28 : vector<64x32xf32>
    %30 = math.exp %29 : vector<64x32xf32>
    %cst_13 = arith.constant dense<0.000000e+00> : vector<32xf32>
    %31 = vector.multi_reduction <add>, %30, %cst_13 [0] : vector<64x32xf32> to vector<32xf32>
    %32 = vector.shape_cast %31 : vector<32xf32> to vector<1x32xf32>
    %33 = vector.broadcast %32 : vector<1x32xf32> to vector<64x32xf32>
    %34 = arith.divf %30, %33 : vector<64x32xf32>
    %cst_14 = arith.constant dense<0.000000e+00> : vector<32x32xf32>
    %35 = tpu.matmul %34, %25, %cst_14 {dimension_numbers = #tpu.dot_dimension_numbers<[0], [0], [1], [1], [0, 1, 1, 1], [], []>} : vector<64x32xf32>, vector<64x32xf32>, vector<32x32xf32> -> vector<32x32xf32>
    %cst_15 = arith.constant dense<0.000000e+00> : vector<64x32xf32>
    %36 = tpu.matmul %23, %35, %cst_15 {dimension_numbers = #tpu.dot_dimension_numbers<[1], [0], [0], [1], [0, 0, 1, 1], [], []>} : vector<64x32xf32>, vector<32x32xf32>, vector<64x32xf32> -> vector<64x32xf32>
    %37 = vector.extract_strided_slice %3 {offsets = [32, 0], sizes = [32, 16], strides = [1, 1]} : vector<128x16xf32> to vector<32x16xf32>
    %cst_16 = arith.constant dense<0.000000e+00> : vector<64x16xf32>
    %38 = tpu.matmul %36, %37, %cst_16 {dimension_numbers = #tpu.dot_dimension_numbers<[1], [0], [0], [1], [0, 0, 1, 1], [], []>} : vector<64x32xf32>, vector<32x16xf32>, vector<64x16xf32> -> vector<64x16xf32>
    %39 = arith.addf %22, %38 : vector<64x16xf32>
    %40 = vector.extract_strided_slice %4 {offsets = [0, 64], sizes = [64, 32], strides = [1, 1]} : vector<64x384xf32> to vector<64x32xf32>
    %41 = vector.extract_strided_slice %4 {offsets = [0, 192], sizes = [64, 32], strides = [1, 1]} : vector<64x384xf32> to vector<64x32xf32>
    %42 = vector.extract_strided_slice %4 {offsets = [0, 320], sizes = [64, 32], strides = [1, 1]} : vector<64x384xf32> to vector<64x32xf32>
    %cst_17 = arith.constant dense<0xFF800000> : vector<32xf32>
    %43 = vector.multi_reduction <maximumf>, %41, %cst_17 [0] : vector<64x32xf32> to vector<32xf32>
    %44 = vector.shape_cast %43 : vector<32xf32> to vector<1x32xf32>
    %45 = vector.broadcast %44 : vector<1x32xf32> to vector<64x32xf32>
    %46 = arith.subf %41, %45 : vector<64x32xf32>
    %47 = math.exp %46 : vector<64x32xf32>
    %cst_18 = arith.constant dense<0.000000e+00> : vector<32xf32>
    %48 = vector.multi_reduction <add>, %47, %cst_18 [0] : vector<64x32xf32> to vector<32xf32>
    %49 = vector.shape_cast %48 : vector<32xf32> to vector<1x32xf32>
    %50 = vector.broadcast %49 : vector<1x32xf32> to vector<64x32xf32>
    %51 = arith.divf %47, %50 : vector<64x32xf32>
    %cst_19 = arith.constant dense<0.000000e+00> : vector<32x32xf32>
    %52 = tpu.matmul %51, %42, %cst_19 {dimension_numbers = #tpu.dot_dimension_numbers<[0], [0], [1], [1], [0, 1, 1, 1], [], []>} : vector<64x32xf32>, vector<64x32xf32>, vector<32x32xf32> -> vector<32x32xf32>
    %cst_20 = arith.constant dense<0.000000e+00> : vector<64x32xf32>
    %53 = tpu.matmul %40, %52, %cst_20 {dimension_numbers = #tpu.dot_dimension_numbers<[1], [0], [0], [1], [0, 0, 1, 1], [], []>} : vector<64x32xf32>, vector<32x32xf32>, vector<64x32xf32> -> vector<64x32xf32>
    %54 = vector.extract_strided_slice %3 {offsets = [64, 0], sizes = [32, 16], strides = [1, 1]} : vector<128x16xf32> to vector<32x16xf32>
    %cst_21 = arith.constant dense<0.000000e+00> : vector<64x16xf32>
    %55 = tpu.matmul %53, %54, %cst_21 {dimension_numbers = #tpu.dot_dimension_numbers<[1], [0], [0], [1], [0, 0, 1, 1], [], []>} : vector<64x32xf32>, vector<32x16xf32>, vector<64x16xf32> -> vector<64x16xf32>
    %56 = arith.addf %39, %55 : vector<64x16xf32>
    %57 = vector.extract_strided_slice %4 {offsets = [0, 96], sizes = [64, 32], strides = [1, 1]} : vector<64x384xf32> to vector<64x32xf32>
    %58 = vector.extract_strided_slice %4 {offsets = [0, 224], sizes = [64, 32], strides = [1, 1]} : vector<64x384xf32> to vector<64x32xf32>
    %59 = vector.extract_strided_slice %4 {offsets = [0, 352], sizes = [64, 32], strides = [1, 1]} : vector<64x384xf32> to vector<64x32xf32>
    %cst_22 = arith.constant dense<0xFF800000> : vector<32xf32>
    %60 = vector.multi_reduction <maximumf>, %58, %cst_22 [0] : vector<64x32xf32> to vector<32xf32>
    %61 = vector.shape_cast %60 : vector<32xf32> to vector<1x32xf32>
    %62 = vector.broadcast %61 : vector<1x32xf32> to vector<64x32xf32>
    %63 = arith.subf %58, %62 : vector<64x32xf32>
    %64 = math.exp %63 : vector<64x32xf32>
    %cst_23 = arith.constant dense<0.000000e+00> : vector<32xf32>
    %65 = vector.multi_reduction <add>, %64, %cst_23 [0] : vector<64x32xf32> to vector<32xf32>
    %66 = vector.shape_cast %65 : vector<32xf32> to vector<1x32xf32>
    %67 = vector.broadcast %66 : vector<1x32xf32> to vector<64x32xf32>
    %68 = arith.divf %64, %67 : vector<64x32xf32>
    %cst_24 = arith.constant dense<0.000000e+00> : vector<32x32xf32>
    %69 = tpu.matmul %68, %59, %cst_24 {dimension_numbers = #tpu.dot_dimension_numbers<[0], [0], [1], [1], [0, 1, 1, 1], [], []>} : vector<64x32xf32>, vector<64x32xf32>, vector<32x32xf32> -> vector<32x32xf32>
    %cst_25 = arith.constant dense<0.000000e+00> : vector<64x32xf32>
    %70 = tpu.matmul %57, %69, %cst_25 {dimension_numbers = #tpu.dot_dimension_numbers<[1], [0], [0], [1], [0, 0, 1, 1], [], []>} : vector<64x32xf32>, vector<32x32xf32>, vector<64x32xf32> -> vector<64x32xf32>
    %71 = vector.extract_strided_slice %3 {offsets = [96, 0], sizes = [32, 16], strides = [1, 1]} : vector<128x16xf32> to vector<32x16xf32>
    %cst_26 = arith.constant dense<0.000000e+00> : vector<64x16xf32>
    %72 = tpu.matmul %70, %71, %cst_26 {dimension_numbers = #tpu.dot_dimension_numbers<[1], [0], [0], [1], [0, 0, 1, 1], [], []>} : vector<64x32xf32>, vector<32x16xf32>, vector<64x16xf32> -> vector<64x16xf32>
    %73 = arith.addf %56, %72 : vector<64x16xf32>
    %c0_27 = arith.constant 0 : index
    %c0_28 = arith.constant 0 : index
    %74 = vector.load %arg4[%c0_27, %c0_28] : memref<1x16xf32, #tpu.memory_space<vmem>>, vector<1x16xf32>
    %75 = vector.broadcast %74 : vector<1x16xf32> to vector<64x16xf32>
    %76 = arith.addf %73, %75 : vector<64x16xf32>
    %c0_29 = arith.constant 0 : index
    %c0_30 = arith.constant 0 : index
    %c0_31 = arith.constant 0 : index
    %77 = vector.load %arg5[%c0_29, %c0_30, %c0_31] : memref<1x64x16xf32, #tpu.memory_space<vmem>>, vector<1x64x16xf32>
    %78 = vector.shape_cast %77 : vector<1x64x16xf32> to vector<64x16xf32>
    %79 = vector.shape_cast %76 : vector<64x16xf32> to vector<1x64x16xf32>
    tpu.vector_store %arg5[%c0_29, %c0_30, %c0_31], %79 {strides = array<i32>} : memref<1x64x16xf32, #tpu.memory_space<vmem>>, vector<1x64x16xf32>,
    return
  }
  func.func @transform_0(%arg0: i32) -> (i32, i32, i32) {
    %c0_i32 = arith.constant 0 : i32
    %c0_i32_0 = arith.constant 0 : i32
    %c0_i32_1 = arith.constant 0 : i32
    return %arg0, %c0_i32, %c0_i32_0 : i32, i32, i32
  }
  func.func @transform_1(%arg0: i32) -> (i32, i32) {
    %c0_i32 = arith.constant 0 : i32
    %c0_i32_0 = arith.constant 0 : i32
    %c0_i32_1 = arith.constant 0 : i32
    return %c0_i32, %c0_i32_0 : i32, i32
  }
  func.func @transform_2(%arg0: i32) -> (i32, i32) {
    %c0_i32 = arith.constant 0 : i32
    %c0_i32_0 = arith.constant 0 : i32
    %c0_i32_1 = arith.constant 0 : i32
    return %c0_i32, %c0_i32_0 : i32, i32
  }
  func.func @transform_3(%arg0: i32) -> (i32, i32) {
    %c0_i32 = arith.constant 0 : i32
    %c0_i32_0 = arith.constant 0 : i32
    %c0_i32_1 = arith.constant 0 : i32
    return %c0_i32, %c0_i32_0 : i32, i32
  }
  func.func @transform_4(%arg0: i32) -> (i32, i32, i32) {
    %c0_i32 = arith.constant 0 : i32
    %c0_i32_0 = arith.constant 0 : i32
    %c0_i32_1 = arith.constant 0 : i32
    return %arg0, %c0_i32, %c0_i32_0 : i32, i32, i32
  }
}

</mosaic_0001>

<llo_original>
// kernel: tpu_custom_call.1
$region0: #{tpu_custom_call.1}
  #allocation0 [shape = 'u32[]', space=smem, size = 0x4, offset = 0x4, fixed_abs, tag = 'smem constant byte address 0x4 - core index']
  #allocation1 [shape = 'u32[144,128]{1,0:T(1,128)}', space=vmem, size = 0x12000, scoped, tag = 'internal scratch']
  %s0 = inlined_call_operand.vmem [shape: f32[2,64,16], index: 0, kind: input, shape index: {}]
  %s1 = inlined_call_operand.vmem [shape: f32[16,384], index: 1, kind: input, shape index: {}]
  %s2 = inlined_call_operand.vmem [shape: f32[128,16], index: 2, kind: input, shape index: {}]
  %s3 = inlined_call_operand.vmem [shape: f32[1,16], index: 3, kind: input, shape index: {}]
  %s4 = inlined_call_operand.vmem [shape: f32[2,64,16], index: 4, kind: output, shape index: {}]
  %s5 = sld [smem:[#allocation0]]
  $region49: #{tpu_custom_call.1} parent=0
    _
  %s7 = ssub.s32 1, %s5
  %s8 = scalar_select 0, %s7, %s5
  loop: start=0, step=1, limit=4
  $region2: #{tpu_custom_call.1} parent=0 // loop_pre_header
    _
  $region3: #{tpu_custom_call.1} parent=0 // loop_header
    %s10 = sphi 0, %s14
    %p11 = scmp.ge.s32.totalorder %s10, 4
    %s20 = sphi 0, %s22
    %s23 = sphi 0, %s20
    %s24 = sphi 0, %s23
    %s40 = sphi 0, %s24
    %s44 = sphi 0, %s44
    %s46 = sphi 0, %s44
    %s47 = sphi 0, %s46
    %s61 = sphi 0, %s47
    %s65 = sphi 0, %s65
    %s67 = sphi 0, %s65
    %s68 = sphi 0, %s67
    %s82 = sphi 0, %s68
    %s86 = sphi 0, %s86
    %s88 = sphi 0, %s86
    %s89 = sphi 0, %s88
    %s103 = sphi 0, %s89
    %s109 = sphi 0, %s111
    %s112 = sphi 0, %s109
    %s113 = sphi 0, %s112
    %s129 = sphi 0, %s113
  $region4: #{tpu_custom_call.1} parent=0 // loop_header_branch
    %13 = sbr.rel (%p11) target = $region8
  $region5: #{tpu_custom_call.1} parent=0 // loop_body
    %s15 = ssub.s32 %s10, 1
    %s16 = ssub.s32 %s10, 2
    %s17 = sadd.s32 %s10, 1
    %s18 = ssub.s32 %s10, %s17
    %p19 = scmp.eq.s32.totalorder %s18, 0
    %s21 = sadd.s32 %s20, 1
    %s22 = scalar_select %p19, %s20, %s21
    %p25 = pneg %p19
    %p26 = scmp.eq.s32.totalorder %s10, 1
    %p27 = por %p25, %p26
    %p28 = scmp.ne.s32.totalorder %s20, %s23
    %p29 = scmp.eq.s32.totalorder %s10, 0
    %p30 = por %p28, %p29
    %p31 = scmp.ne.s32.totalorder %s20, %s23
    %p32 = scmp.eq.s32.totalorder %s15, 1
    %p33 = por %p31, %p32
    %p34 = scmp.ne.s32.totalorder %s23, %s24
    %p35 = scmp.eq.s32.totalorder %s15, 0
    %p36 = por %p34, %p35
    %p37 = scmp.ne.s32.totalorder %s23, %s24
    %p38 = scmp.eq.s32.totalorder %s16, 1
    %p39 = por %p37, %p38
    %p41 = scmp.ne.s32.totalorder %s24, %s40
    %p42 = scmp.eq.s32.totalorder %s16, 0
    %p43 = por %p41, %p42
    %s45 = sadd.s32 %s44, 1
    %p48 = scmp.eq.s32.totalorder %s10, 1
    %p49 = scmp.ne.s32.totalorder %s44, %s46
    %p50 = scmp.eq.s32.totalorder %s10, 0
    %p51 = por %p49, %p50
    %p52 = scmp.ne.s32.totalorder %s44, %s46
    %p53 = scmp.eq.s32.totalorder %s15, 1
    %p54 = por %p52, %p53
    %p55 = scmp.ne.s32.totalorder %s46, %s47
    %p56 = scmp.eq.s32.totalorder %s15, 0
    %p57 = por %p55, %p56
    %p58 = scmp.ne.s32.totalorder %s46, %s47
    %p59 = scmp.eq.s32.totalorder %s16, 1
    %p60 = por %p58, %p59
    %p62 = scmp.ne.s32.totalorder %s47, %s61
    %p63 = scmp.eq.s32.totalorder %s16, 0
    %p64 = por %p62, %p63
    %s66 = sadd.s32 %s65, 1
    %p69 = scmp.eq.s32.totalorder %s10, 1
    %p70 = scmp.ne.s32.totalorder %s65, %s67
    %p71 = scmp.eq.s32.totalorder %s10, 0
    %p72 = por %p70, %p71
    %p73 = scmp.ne.s32.totalorder %s65, %s67
    %p74 = scmp.eq.s32.totalorder %s15, 1
    %p75 = por %p73, %p74
    %p76 = scmp.ne.s32.totalorder %s67, %s68
    %p77 = scmp.eq.s32.totalorder %s15, 0
    %p78 = por %p76, %p77
    %p79 = scmp.ne.s32.totalorder %s67, %s68
    %p80 = scmp.eq.s32.totalorder %s16, 1
    %p81 = por %p79, %p80
    %p83 = scmp.ne.s32.totalorder %s68, %s82
    %p84 = scmp.eq.s32.totalorder %s16, 0
    %p85 = por %p83, %p84
    %s87 = sadd.s32 %s86, 1
    %p90 = scmp.eq.s32.totalorder %s10, 1
    %p91 = scmp.ne.s32.totalorder %s86, %s88
    %p92 = scmp.eq.s32.totalorder %s10, 0
    %p93 = por %p91, %p92
    %p94 = scmp.ne.s32.totalorder %s86, %s88
    %p95 = scmp.eq.s32.totalorder %s15, 1
    %p96 = por %p94, %p95
    %p97 = scmp.ne.s32.totalorder %s88, %s89
    %p98 = scmp.eq.s32.totalorder %s15, 0
    %p99 = por %p97, %p98
    %p100 = scmp.ne.s32.totalorder %s88, %s89
    %p101 = scmp.eq.s32.totalorder %s16, 1
    %p102 = por %p100, %p101
    %p104 = scmp.ne.s32.totalorder %s89, %s103
    %p105 = scmp.eq.s32.totalorder %s16, 0
    %p106 = por %p104, %p105
    %s107 = ssub.s32 %s10, %s17
    %p108 = scmp.eq.s32.totalorder %s107, 0
    %s110 = sadd.s32 %s109, 1
    %s111 = scalar_select %p108, %s109, %s110
    %p114 = pneg %p108
    %p115 = scmp.eq.s32.totalorder %s10, 1
    %p116 = por %p114, %p115
    %p117 = scmp.ne.s32.totalorder %s109, %s112
    %p118 = scmp.eq.s32.totalorder %s10, 0
    %p119 = por %p117, %p118
    %p120 = scmp.ne.s32.totalorder %s109, %s112
    %p121 = scmp.eq.s32.totalorder %s15, 1
    %p122 = por %p120, %p121
    %p123 = scmp.ne.s32.totalorder %s112, %s113
    %p124 = scmp.eq.s32.totalorder %s15, 0
    %p125 = por %p123, %p124
    %p126 = scmp.ne.s32.totalorder %s112, %s113
    %p127 = scmp.eq.s32.totalorder %s16, 1
    %p128 = por %p126, %p127
    %p130 = scmp.ne.s32.totalorder %s113, %s129
    %p131 = scmp.eq.s32.totalorder %s16, 0
    %p132 = por %p130, %p131
    %p133 = scmp.le.s32.totalorder 1, %s10
    %p134 = scmp.lt.s32.totalorder %s10, 3
    %p135 = pnand %p133, %p134
    %p136 = pneg %p135
    // Predicated region
    $region9: #{tpu_custom_call.1} parent=5 // pred_check
      _
    $region10: #{tpu_custom_call.1} parent=5 // pred_check_branch
      %138 = sbr.rel (%p135) target = $region12
    $region11: #{tpu_custom_call.1} parent=5 // pred_region
      %s139 = ssub.s32 %s10, 1
      // Predicated region
      $region13: #{tpu_custom_call.1} parent=11 // pred_check
        %p140 = pneg %p57
      $region14: #{tpu_custom_call.1} parent=11 // pred_check_branch
        %142 = sbr.rel (%p140) target = $region16
      $region15: #{tpu_custom_call.1} parent=11 // pred_region
        _
      $region16: #{tpu_custom_call.1} parent=11 // pred_fallthru
        _
      // Predicated region
      $region17: #{tpu_custom_call.1} parent=11 // pred_check
        %p143 = pneg %p78
      $region18: #{tpu_custom_call.1} parent=11 // pred_check_branch
        %145 = sbr.rel (%p143) target = $region20
      $region19: #{tpu_custom_call.1} parent=11 // pred_region
        _
      $region20: #{tpu_custom_call.1} parent=11 // pred_fallthru
        _
      // Predicated region
      $region21: #{tpu_custom_call.1} parent=11 // pred_check
        %p146 = pneg %p99
      $region22: #{tpu_custom_call.1} parent=11 // pred_check_branch
        %148 = sbr.rel (%p146) target = $region24
      $region23: #{tpu_custom_call.1} parent=11 // pred_region
        _
      $region24: #{tpu_custom_call.1} parent=11 // pred_fallthru
        _
    $region12: #{tpu_custom_call.1} parent=5 // pred_fallthru
      _
    %p149 = scmp.lt.s32.totalorder %s10, 2
    // Predicated region
    $region25: #{tpu_custom_call.1} parent=5 // pred_check
      %p150 = pneg %p149
    $region26: #{tpu_custom_call.1} parent=5 // pred_check_branch
      %152 = sbr.rel (%p150) target = $region28
    $region27: #{tpu_custom_call.1} parent=5 // pred_region
      // Predicated region
      $region29: #{tpu_custom_call.1} parent=27 // pred_check
        %p153 = pneg %p30
      $region30: #{tpu_custom_call.1} parent=27 // pred_check_branch
        %155 = sbr.rel (%p153) target = $region32
      $region31: #{tpu_custom_call.1} parent=27 // pred_region
        %p156 = scmp.lt.s32.totalorder %s10, 1
        %s157 = scalar_select %p156, %s10, 1
        %s158 = smul.addr %s157, 8
        %s159 = smul.addr %s158, 8
        %s160 = scalar_lea.vmem %s0, %s159
      $region32: #{tpu_custom_call.1} parent=27 // pred_fallthru
        _
    $region28: #{tpu_custom_call.1} parent=5 // pred_fallthru
      _
    %p161 = scmp.le.s32.totalorder 1, %s10
    %p162 = scmp.lt.s32.totalorder %s10, 3
    %p163 = pnand %p161, %p162
    %p164 = pneg %p163
    // Predicated region
    $region33: #{tpu_custom_call.1} parent=5 // pred_check
      _
    $region34: #{tpu_custom_call.1} parent=5 // pred_check_branch
      %166 = sbr.rel (%p163) target = $region36
    $region35: #{tpu_custom_call.1} parent=5 // pred_region
      %s167 = ssub.s32 %s10, 1
      %p168 = scmp.lt.s32.totalorder %s15, 1
      %s169 = scalar_select %p168, %s15, 1
      %s170 = smul.addr %s169, 8
      %s171 = smul.addr %s170, 8
      %s172 = scalar_lea.vmem %s0, %s171
      %p173 = pneg %p36
      %p174 = pneg %p33
      %p175 = pneg %p57
      %p176 = pneg %p54
      %p177 = pneg %p78
      %p178 = pneg %p75
      %p179 = pneg %p99
      %p180 = pneg %p96
      %p181 = pneg %p125
      %p182 = pneg %p122
      %p183 = scmp.lt.s32.totalorder %s15, 1
      %s184 = scalar_select %p183, %s15, 1
      %s185 = smul.addr %s184, 8
      %s186 = smul.addr %s185, 8
      %s187 = scalar_lea.vmem %s4, %s186
      %p188 = scmp.lt.s32.totalorder %s15, 1
      %s189 = scalar_select %p188, %s15, 1
      %s190 = smul.addr %s189, 8
      %s191 = smul.addr %s190, 8
      %s192 = scalar_lea.vmem %s0, %s191
      %p193 = scmp.lt.s32.totalorder %s15, 1
      %s194 = scalar_select %p193, %s15, 1
      %s195 = smul.addr %s194, 8
      %s196 = smul.addr %s195, 8
      %s197 = scalar_lea.vmem %s4, %s196
      %v198 = vld [vmem:[%s192] sm:$0xff]
      %v199 = vld [vmem:[%s192 + $0x8] sm:$0xff]
      %v200 = vld [vmem:[%s192 + $0x10] sm:$0xff]
      %v201 = vld [vmem:[%s192 + $0x18] sm:$0xff]
      %v202 = vld [vmem:[%s192 + $0x20] sm:$0xff]
      %v203 = vld [vmem:[%s192 + $0x28] sm:$0xff]
      %v204 = vld [vmem:[%s192 + $0x30] sm:$0xff]
      %v205 = vld [vmem:[%s192 + $0x38] sm:$0xff]
      %v206 = vld [vmem:[%s1] sm:$0xff]
      %v207 = vld [vmem:[%s1 + $0x8] sm:$0xff]
      %v208 = vld [vmem:[%s1 + $0x10] sm:$0xff]
      %v209 = vld [vmem:[%s1 + $0x18] sm:$0xff]
      %v210 = vld [vmem:[%s1 + $0x20] sm:$0xff]
      %v211 = vld [vmem:[%s1 + $0x28] sm:$0xff]
      %v212 = vld [vmem:[%s2] sm:$0xff]
      %v213 = vld [vmem:[%s2 + $0x8] sm:$0xff]
      %v214 = vld [vmem:[%s2 + $0x10] sm:$0xff]
      %v215 = vld [vmem:[%s2 + $0x18] sm:$0xff]
      %v216 = vld [vmem:[%s2 + $0x20] sm:$0xff]
      %v217 = vld [vmem:[%s2 + $0x28] sm:$0xff]
      %v218 = vld [vmem:[%s2 + $0x30] sm:$0xff]
      %v219 = vld [vmem:[%s2 + $0x38] sm:$0xff]
      %v220 = vld [vmem:[%s2 + $0x40] sm:$0xff]
      %v221 = vld [vmem:[%s2 + $0x48] sm:$0xff]
      %v222 = vld [vmem:[%s2 + $0x50] sm:$0xff]
      %v223 = vld [vmem:[%s2 + $0x58] sm:$0xff]
      %v224 = vld [vmem:[%s2 + $0x60] sm:$0xff]
      %v225 = vld [vmem:[%s2 + $0x68] sm:$0xff]
      %v226 = vld [vmem:[%s2 + $0x70] sm:$0xff]
      %v227 = vld [vmem:[%s2 + $0x78] sm:$0xff]
      %vm228 = vcmask 130048
      %v230 = vsel %vm228, %v198, 0
      %v233 = vsel %vm228, %v199, 0
      %v236 = vsel %vm228, %v200, 0
      %v239 = vsel %vm228, %v201, 0
      %v242 = vsel %vm228, %v202, 0
      %v245 = vsel %vm228, %v203, 0
      %v248 = vsel %vm228, %v204, 0
      %v251 = vsel %vm228, %v205, 0
      %253 = vmatprep.subr.mxu0 %v207
      %254 = vmatpush1.msra.mxu0 %v206
      %255 = vmatprep.subr.mxu0 %v210
      %256 = vmatpush1.msra.mxu0 %v209
      %257 = vmatprep.subr.mxu0 0.0
      %258 = vmatpush1.msra.mxu0 0.0
      %259 = vmatprep.subr.mxu0 0.0
      %260 = vmatpush1.msra.mxu0 0.0
      %261 = vmatprep.subr.mxu0 0.0
      %262 = vmatpush1.msra.mxu0 0.0
      %263 = vmatprep.subr.mxu0 0.0
      %264 = vmatpush1.msra.mxu0 0.0
      %265 = vmatprep.subr.mxu0 0.0
      %266 = vmatpush1.msra.mxu0 0.0
      %267 = vmatprep.subr.mxu0 0.0
      %268 = vmatpush1.msra.mxu0 0.0
      %269 = vmatprep.subr.mxu0 0.0
      %270 = vmatpush1.msra.mxu0 0.0
      %271 = vmatprep.subr.mxu0 0.0
      %272 = vmatpush1.msra.mxu0 0.0
      %273 = vmatprep.subr.mxu0 0.0
      %274 = vmatpush1.msra.mxu0 0.0
      %275 = vmatprep.subr.mxu0 0.0
      %276 = vmatpush1.msra.mxu0 0.0
      %277 = vmatprep.subr.mxu0 0.0
      %278 = vmatpush1.msra.mxu0 0.0
      %279 = vmatprep.subr.mxu0 0.0
      %280 = vmatpush1.msra.mxu0 0.0
      %281 = vmatprep.subr.mxu0 0.0
      %282 = vmatpush1.msra.mxu0 0.0
      %283 = vmatprep.subr.mxu0 0.0
      %284 = vmatpush1.msra.mxu0 0.0
      %285 = vmatprep.subr.mxu0 0.0
      %286 = vmatpush1.msra.mxu0 0.0
      %287 = vmatprep.subr.mxu0 0.0
      %288 = vmatpush1.msra.mxu0 0.0
      %289 = vmatprep.subr.mxu0 0.0
      %290 = vmatpush1.msra.mxu0 0.0
      %291 = vmatprep.subr.mxu0 0.0
      %292 = vmatpush1.msra.mxu0 0.0
      %293 = vmatprep.subr.mxu0 0.0
      %294 = vmatpush1.msra.mxu0 0.0
      %295 = vmatprep.subr.mxu0 0.0
      %296 = vmatpush1.msra.mxu0 0.0
      %297 = vmatprep.subr.mxu0 0.0
      %298 = vmatpush1.msra.mxu0 0.0
      %299 = vmatprep.subr.mxu0 0.0
      %300 = vmatpush1.msra.mxu0 0.0
      %301 = vmatprep.subr.mxu0 0.0
      %302 = vmatpush1.msra.mxu0 0.0
      %303 = vmatprep.subr.mxu0 0.0
      %304 = vmatpush1.msra.mxu0 0.0
      %305 = vmatprep.subr.mxu0 0.0
      %306 = vmatpush1.msra.mxu0 0.0
      %307 = vmatprep.subr.mxu0 0.0
      %308 = vmatpush1.msra.mxu0 0.0
      %309 = vmatprep.subr.mxu0 0.0
      %310 = vmatpush1.msra.mxu0 0.0
      %311 = vmatprep.subr.mxu0 0.0
      %312 = vmatpush1.msra.mxu0 0.0
      %313 = vmatprep.subr.mxu0 0.0
      %314 = vmatpush1.msra.mxu0 0.0
      %315 = vmatprep.subr.mxu0 0.0
      %316 = vmatpush1.msra.mxu0 0.0
      %317 = vmatprep.mubr.f32.mxu0 0.0
      %318 = vmatmul.mubr.f32.gmra.mrb[0].mxu0 %v230
      %v319 = vpop.f32.mrb[0].mxu0
      %v320 = vadd.f32 0.0, %v319
      %v321 = vpop.f32.mrb[0].mxu0
      %v322 = vadd.f32 0.0, %v321
      %323 = vmatprep.mubr.f32.mxu0 0.0
      %324 = vmatmul.mubr.f32.gmra.mrb[0].mxu0 %v233
      %v325 = vpop.f32.mrb[0].mxu0
      %v326 = vadd.f32 0.0, %v325
      %v327 = vpop.f32.mrb[0].mxu0
      %v328 = vadd.f32 0.0, %v327
      %329 = vmatprep.mubr.f32.mxu0 0.0
      %330 = vmatmul.mubr.f32.gmra.mrb[0].mxu0 %v236
      %v331 = vpop.f32.mrb[0].mxu0
      %v332 = vadd.f32 0.0, %v331
      %v333 = vpop.f32.mrb[0].mxu0
      %v334 = vadd.f32 0.0, %v333
      %335 = vmatprep.mubr.f32.mxu0 0.0
      %336 = vmatmul.mubr.f32.gmra.mrb[0].mxu0 %v239
      %v337 = vpop.f32.mrb[0].mxu0
      %v338 = vadd.f32 0.0, %v337
      %v339 = vpop.f32.mrb[0].mxu0
      %v340 = vadd.f32 0.0, %v339
      %341 = vmatprep.mubr.f32.mxu0 0.0
      %342 = vmatmul.mubr.f32.gmra.mrb[0].mxu0 %v242
      %v343 = vpop.f32.mrb[0].mxu0
      %v344 = vadd.f32 0.0, %v343
      %v345 = vpop.f32.mrb[0].mxu0
      %v346 = vadd.f32 0.0, %v345
      %347 = vmatprep.mubr.f32.mxu0 0.0
      %348 = vmatmul.mubr.f32.gmra.mrb[0].mxu0 %v245
      %v349 = vpop.f32.mrb[0].mxu0
      %v350 = vadd.f32 0.0, %v349
      %v351 = vpop.f32.mrb[0].mxu0
      %v352 = vadd.f32 0.0, %v351
      %353 = vmatprep.mubr.f32.mxu0 0.0
      %354 = vmatmul.mubr.f32.gmra.mrb[0].mxu0 %v248
      %v355 = vpop.f32.mrb[0].mxu0
      %v356 = vadd.f32 0.0, %v355
      %v357 = vpop.f32.mrb[0].mxu0
      %v358 = vadd.f32 0.0, %v357
      %359 = vmatprep.mubr.f32.mxu0 0.0
      %360 = vmatmul.mubr.f32.gmra.mrb[0].mxu0 %v251
      %v361 = vpop.f32.mrb[0].mxu0
      %v362 = vadd.f32 0.0, %v361
      %v363 = vpop.f32.mrb[0].mxu0
      %v364 = vadd.f32 0.0, %v363
      %365 = vdwg.mxu0
      %366 = vmatprep.subr.mxu0 0.0
      %367 = vmatpush1.msra.mxu0 %v208
      %368 = vmatprep.subr.mxu0 0.0
      %369 = vmatpush1.msra.mxu0 %v211
      %370 = vmatprep.subr.mxu0 0.0
      %371 = vmatpush1.msra.mxu0 0.0
      %372 = vmatprep.subr.mxu0 0.0
      %373 = vmatpush1.msra.mxu0 0.0
      %374 = vmatprep.subr.mxu0 0.0
      %375 = vmatpush1.msra.mxu0 0.0
      %376 = vmatprep.subr.mxu0 0.0
      %377 = vmatpush1.msra.mxu0 0.0
      %378 = vmatprep.subr.mxu0 0.0
      %379 = vmatpush1.msra.mxu0 0.0
      %380 = vmatprep.subr.mxu0 0.0
      %381 = vmatpush1.msra.mxu0 0.0
      %382 = vmatprep.subr.mxu0 0.0
      %383 = vmatpush1.msra.mxu0 0.0
      %384 = vmatprep.subr.mxu0 0.0
      %385 = vmatpush1.msra.mxu0 0.0
      %386 = vmatprep.subr.mxu0 0.0
      %387 = vmatpush1.msra.mxu0 0.0
      %388 = vmatprep.subr.mxu0 0.0
      %389 = vmatpush1.msra.mxu0 0.0
      %390 = vmatprep.subr.mxu0 0.0
      %391 = vmatpush1.msra.mxu0 0.0
      %392 = vmatprep.subr.mxu0 0.0
      %393 = vmatpush1.msra.mxu0 0.0
      %394 = vmatprep.subr.mxu0 0.0
      %395 = vmatpush1.msra.mxu0 0.0
      %396 = vmatprep.subr.mxu0 0.0
      %397 = vmatpush1.msra.mxu0 0.0
      %398 = vmatprep.subr.mxu0 0.0
      %399 = vmatpush1.msra.mxu0 0.0
      %400 = vmatprep.subr.mxu0 0.0
      %401 = vmatpush1.msra.mxu0 0.0
      %402 = vmatprep.subr.mxu0 0.0
      %403 = vmatpush1.msra.mxu0 0.0
      %404 = vmatprep.subr.mxu0 0.0
      %405 = vmatpush1.msra.mxu0 0.0
      %406 = vmatprep.subr.mxu0 0.0
      %407 = vmatpush1.msra.mxu0 0.0
      %408 = vmatprep.subr.mxu0 0.0
      %409 = vmatpush1.msra.mxu0 0.0
      %410 = vmatprep.subr.mxu0 0.0
      %411 = vmatpush1.msra.mxu0 0.0
      %412 = vmatprep.subr.mxu0 0.0
      %413 = vmatpush1.msra.mxu0 0.0
      %414 = vmatprep.subr.mxu0 0.0
      %415 = vmatpush1.msra.mxu0 0.0
      %416 = vmatprep.subr.mxu0 0.0
      %417 = vmatpush1.msra.mxu0 0.0
      %418 = vmatprep.subr.mxu0 0.0
      %419 = vmatpush1.msra.mxu0 0.0
      %420 = vmatprep.subr.mxu0 0.0
      %421 = vmatpush1.msra.mxu0 0.0
      %422 = vmatprep.subr.mxu0 0.0
      %423 = vmatpush1.msra.mxu0 0.0
      %424 = vmatprep.subr.mxu0 0.0
      %425 = vmatpush1.msra.mxu0 0.0
      %426 = vmatprep.subr.mxu0 0.0
      %427 = vmatpush1.msra.mxu0 0.0
      %428 = vmatprep.subr.mxu0 0.0
      %429 = vmatpush1.msra.mxu0 0.0
      %430 = vmatprep.mubr.f32.mxu0 0.0
      %431 = vmatmul.mubr.f32.gmra.mrb[0].mxu0 %v230
      %v432 = vpop.f32.mrb[0].mxu0
      %v433 = vadd.f32 0.0, %v432
      %v434 = vpop.f32.mrb[0].mxu0
      %435 = vmatprep.mubr.f32.mxu0 0.0
      %436 = vmatmul.mubr.f32.gmra.mrb[0].mxu0 %v233
      %v437 = vpop.f32.mrb[0].mxu0
      %v438 = vadd.f32 0.0, %v437
      %v439 = vpop.f32.mrb[0].mxu0
      %440 = vmatprep.mubr.f32.mxu0 0.0
      %441 = vmatmul.mubr.f32.gmra.mrb[0].mxu0 %v236
      %v442 = vpop.f32.mrb[0].mxu0
      %v443 = vadd.f32 0.0, %v442
      %v444 = vpop.f32.mrb[0].mxu0
      %445 = vmatprep.mubr.f32.mxu0 0.0
      %446 = vmatmul.mubr.f32.gmra.mrb[0].mxu0 %v239
      %v447 = vpop.f32.mrb[0].mxu0
      %v448 = vadd.f32 0.0, %v447
      %v449 = vpop.f32.mrb[0].mxu0
      %450 = vmatprep.mubr.f32.mxu0 0.0
      %451 = vmatmul.mubr.f32.gmra.mrb[0].mxu0 %v242
      %v452 = vpop.f32.mrb[0].mxu0
      %v453 = vadd.f32 0.0, %v452
      %v454 = vpop.f32.mrb[0].mxu0
      %455 = vmatprep.mubr.f32.mxu0 0.0
      %456 = vmatmul.mubr.f32.gmra.mrb[0].mxu0 %v245
      %v457 = vpop.f32.mrb[0].mxu0
      %v458 = vadd.f32 0.0, %v457
      %v459 = vpop.f32.mrb[0].mxu0
      %460 = vmatprep.mubr.f32.mxu0 0.0
      %461 = vmatmul.mubr.f32.gmra.mrb[0].mxu0 %v248
      %v462 = vpop.f32.mrb[0].mxu0
      %v463 = vadd.f32 0.0, %v462
      %v464 = vpop.f32.mrb[0].mxu0
      %465 = vmatprep.mubr.f32.mxu0 0.0
      %466 = vmatmul.mubr.f32.gmra.mrb[0].mxu0 %v251
      %v467 = vpop.f32.mrb[0].mxu0
      %v468 = vadd.f32 0.0, %v467
      %v469 = vpop.f32.mrb[0].mxu0
      %470 = vdwg.mxu0
      %vm471 = vcmask 261120
      %v472 = vsel %vm471, %v322, -inf
      %v473 = vsel %vm471, %v328, -inf
      %v474 = vsel %vm471, %v334, -inf
      %v475 = vsel %vm471, %v340, -inf
      %v476 = vsel %vm471, %v346, -inf
      %v477 = vmax.f32 %v472, %v476
      %v478 = vsel %vm471, %v352, -inf
      %v479 = vmax.f32 %v473, %v478
      %v480 = vsel %vm471, %v358, -inf
      %v481 = vmax.f32 %v474, %v480
      %v482 = vsel %vm471, %v364, -inf
      %v483 = vmax.f32 %v475, %v482
      %v484 = vmax.f32 %v477, %v479
      %v485 = vmax.f32 %v481, %v483
      %v486 = vmax.f32 %v484, %v485
      %v487 = vrot.slane %v486, 4
      %v488 = vmax.f32 %v486, %v487
      %v489 = vrot.slane %v488, 2
      %v490 = vmax.f32 %v488, %v489
      %v491 = vrot.slane %v490, 1
      %v492 = vmax.f32 %v490, %v491
      %v493 = vsub.f32 %v322, %v492
      %v494 = vsub.f32 %v328, %v492
      %v495 = vsub.f32 %v334, %v492
      %v496 = vsub.f32 %v340, %v492
      %v497 = vsub.f32 %v346, %v492
      %v498 = vsub.f32 %v352, %v492
      %v499 = vsub.f32 %v358, %v492
      %v500 = vsub.f32 %v364, %v492
      %v501 = vmul.f32 %v493, 1.442695
      %v502 = vpow.pop %v501
      %v503 = vmul.f32 %v494, 1.442695
      %v504 = vpow.pop %v503
      %v505 = vmul.f32 %v495, 1.442695
      %v506 = vpow.pop %v505
      %v507 = vmul.f32 %v496, 1.442695
      %v508 = vpow.pop %v507
      %v509 = vmul.f32 %v497, 1.442695
      %v510 = vpow.pop %v509
      %v511 = vmul.f32 %v498, 1.442695
      %v512 = vpow.pop %v511
      %v513 = vmul.f32 %v499, 1.442695
      %v514 = vpow.pop %v513
      %v515 = vmul.f32 %v500, 1.442695
      %v516 = vpow.pop %v515
      %v517 = vsel %vm471, %v502, 0.0
      %v518 = vsel %vm471, %v504, 0.0
      %v519 = vadd.f32 %v517, %v518
      %v520 = vsel %vm471, %v506, 0.0
      %v521 = vadd.f32 %v519, %v520
      %v522 = vsel %vm471, %v508, 0.0
      %v523 = vadd.f32 %v521, %v522
      %v524 = vsel %vm471, %v510, 0.0
      %v525 = vadd.f32 %v523, %v524
      %v526 = vsel %vm471, %v512, 0.0
      %v527 = vadd.f32 %v525, %v526
      %v528 = vsel %vm471, %v514, 0.0
      %v529 = vadd.f32 %v527, %v528
      %v530 = vsel %vm471, %v516, 0.0
      %v531 = vadd.f32 %v529, %v530
      %v532 = vrot.slane %v531, 4
      %v533 = vadd.f32 %v531, %v532
      %v534 = vrot.slane %v533, 2
      %v535 = vadd.f32 %v533, %v534
      %v536 = vrot.slane %v535, 1
      %v537 = vadd.f32 %v535, %v536
      %v538 = vrcp.pop %v537
      %v539 = vmul.f32 %v502, %v538
      %v540 = vmul.f32 %v504, %v538
      %v541 = vmul.f32 %v506, %v538
      %v542 = vmul.f32 %v508, %v538
      %v543 = vmul.f32 %v510, %v538
      %v544 = vmul.f32 %v512, %v538
      %v545 = vmul.f32 %v514, %v538
      %v546 = vmul.f32 %v516, %v538
      %547 = vxpose.xlu0.b32.start [1/16] %v539, 128
      %548 = vxpose.xlu0.b32.cont [2/16] %v540, 128
      %549 = vxpose.xlu0.b32.cont [3/16] %v541, 128
      %550 = vxpose.xlu0.b32.cont [4/16] %v542, 128
      %551 = vxpose.xlu0.b32.cont [5/16] %v543, 128
      %552 = vxpose.xlu0.b32.cont [6/16] %v544, 128
      %553 = vxpose.xlu0.b32.cont [7/16] %v545, 128
      %554 = vxpose.xlu0.b32.cont [8/16] %v546, 128
      %555 = vxpose.xlu0.b32.cont [9/16] 0.0, 128
      %556 = vxpose.xlu0.b32.cont [10/16] 0.0, 128
      %557 = vxpose.xlu0.b32.cont [11/16] 0.0, 128
      %558 = vxpose.xlu0.b32.cont [12/16] 0.0, 128
      %559 = vxpose.xlu0.b32.cont [13/16] 0.0, 128
      %560 = vxpose.xlu0.b32.cont [14/16] 0.0, 128
      %561 = vxpose.xlu0.b32.cont [15/16] 0.0, 128
      %562 = vxpose.xlu0.b32.end [16/16] 0.0, 128
      %v563 = vpop.trf.xlu0
      %v564 = vpop.trf.xlu0
      %v565 = vpop.trf.xlu0
      %v566 = vpop.trf.xlu0
      %v567 = vpop.trf.xlu0
      %v568 = vpop.trf.xlu0
      %v569 = vpop.trf.xlu0
      %v570 = vpop.trf.xlu0
      %v571 = vpop.trf.xlu0
      %v572 = vpop.trf.xlu0
      %v573 = vpop.trf.xlu0
      %v574 = vpop.trf.xlu0
      %v575 = vpop.trf.xlu0
      %v576 = vpop.trf.xlu0
      %v577 = vpop.trf.xlu0
      %v578 = vpop.trf.xlu0
      %vm579 = vcmask 523264
      %v581 = vsel %vm579, %v563, 0
      %v584 = vsel %vm579, %v564, 0
      %v587 = vsel %vm579, %v565, 0
      %v590 = vsel %vm579, %v566, 0
      %592 = vmatprep.subr.mxu0 0.0
      %593 = vmatpush1.msra.mxu0 %v433
      %594 = vmatprep.subr.mxu0 0.0
      %595 = vmatpush1.msra.mxu0 %v438
      %596 = vmatprep.subr.mxu0 0.0
      %597 = vmatpush1.msra.mxu0 %v443
      %598 = vmatprep.subr.mxu0 0.0
      %599 = vmatpush1.msra.mxu0 %v448
      %600 = vmatprep.subr.mxu0 0.0
      %601 = vmatpush1.msra.mxu0 %v453
      %602 = vmatprep.subr.mxu0 0.0
      %603 = vmatpush1.msra.mxu0 %v458
      %604 = vmatprep.subr.mxu0 0.0
      %605 = vmatpush1.msra.mxu0 %v463
      %606 = vmatprep.subr.mxu0 0.0
      %607 = vmatpush1.msra.mxu0 %v468
      %608 = vmatprep.subr.mxu0 0.0
      %609 = vmatpush1.msra.mxu0 0.0
      %610 = vmatprep.subr.mxu0 0.0
      %611 = vmatpush1.msra.mxu0 0.0
      %612 = vmatprep.subr.mxu0 0.0
      %613 = vmatpush1.msra.mxu0 0.0
      %614 = vmatprep.subr.mxu0 0.0
      %615 = vmatpush1.msra.mxu0 0.0
      %616 = vmatprep.subr.mxu0 0.0
      %617 = vmatpush1.msra.mxu0 0.0
      %618 = vmatprep.subr.mxu0 0.0
      %619 = vmatpush1.msra.mxu0 0.0
      %620 = vmatprep.subr.mxu0 0.0
      %621 = vmatpush1.msra.mxu0 0.0
      %622 = vmatprep.subr.mxu0 0.0
      %623 = vmatpush1.msra.mxu0 0.0
      %624 = vmatprep.subr.mxu0 0.0
      %625 = vmatpush1.msra.mxu0 0.0
      %626 = vmatprep.subr.mxu0 0.0
      %627 = vmatpush1.msra.mxu0 0.0
      %628 = vmatprep.subr.mxu0 0.0
      %629 = vmatpush1.msra.mxu0 0.0
      %630 = vmatprep.subr.mxu0 0.0
      %631 = vmatpush1.msra.mxu0 0.0
      %632 = vmatprep.subr.mxu0 0.0
      %633 = vmatpush1.msra.mxu0 0.0
      %634 = vmatprep.subr.mxu0 0.0
      %635 = vmatpush1.msra.mxu0 0.0
      %636 = vmatprep.subr.mxu0 0.0
      %637 = vmatpush1.msra.mxu0 0.0
      %638 = vmatprep.subr.mxu0 0.0
      %639 = vmatpush1.msra.mxu0 0.0
      %640 = vmatprep.subr.mxu0 0.0
      %641 = vmatpush1.msra.mxu0 0.0
      %642 = vmatprep.subr.mxu0 0.0
      %643 = vmatpush1.msra.mxu0 0.0
      %644 = vmatprep.subr.mxu0 0.0
      %645 = vmatpush1.msra.mxu0 0.0
      %646 = vmatprep.subr.mxu0 0.0
      %647 = vmatpush1.msra.mxu0 0.0
      %648 = vmatprep.subr.mxu0 0.0
      %649 = vmatpush1.msra.mxu0 0.0
      %650 = vmatprep.subr.mxu0 0.0
      %651 = vmatpush1.msra.mxu0 0.0
      %652 = vmatprep.subr.mxu0 0.0
      %653 = vmatpush1.msra.mxu0 0.0
      %654 = vmatprep.subr.mxu0 0.0
      %655 = vmatpush1.msra.mxu0 0.0
      %656 = vmatprep.mubr.f32.mxu0 0.0
      %657 = vmatmul.mubr.f32.gmra.mrb[0].mxu0 %v581
      %v658 = vpop.f32.mrb[0].mxu0
      %v659 = vadd.f32 0.0, %v658
      %v660 = vpop.f32.mrb[0].mxu0
      %661 = vmatprep.mubr.f32.mxu0 0.0
      %662 = vmatmul.mubr.f32.gmra.mrb[0].mxu0 %v584
      %v663 = vpop.f32.mrb[0].mxu0
      %v664 = vadd.f32 0.0, %v663
      %v665 = vpop.f32.mrb[0].mxu0
      %666 = vmatprep.mubr.f32.mxu0 0.0
      %667 = vmatmul.mubr.f32.gmra.mrb[0].mxu0 %v587
      %v668 = vpop.f32.mrb[0].mxu0
      %v669 = vadd.f32 0.0, %v668
      %v670 = vpop.f32.mrb[0].mxu0
      %671 = vmatprep.mubr.f32.mxu0 0.0
      %672 = vmatmul.mubr.f32.gmra.mrb[0].mxu0 %v590
      %v673 = vpop.f32.mrb[0].mxu0
      %v674 = vadd.f32 0.0, %v673
      %v675 = vpop.f32.mrb[0].mxu0
      %676 = vdwg.mxu0
      %v678 = vsel %vm471, %v320, 0
      %v681 = vsel %vm471, %v326, 0
      %v684 = vsel %vm471, %v332, 0
      %v687 = vsel %vm471, %v338, 0
      %v690 = vsel %vm471, %v344, 0
      %v693 = vsel %vm471, %v350, 0
      %v696 = vsel %vm471, %v356, 0
      %v699 = vsel %vm471, %v362, 0
      %701 = vmatprep.subr.mxu0 0.0
      %702 = vmatpush1.msra.mxu0 %v659
      %703 = vmatprep.subr.mxu0 0.0
      %704 = vmatpush1.msra.mxu0 %v664
      %705 = vmatprep.subr.mxu0 0.0
      %706 = vmatpush1.msra.mxu0 %v669
      %707 = vmatprep.subr.mxu0 0.0
      %708 = vmatpush1.msra.mxu0 %v674
      %709 = vmatprep.subr.mxu0 0.0
      %710 = vmatpush1.msra.mxu0 0.0
      %711 = vmatprep.subr.mxu0 0.0
      %712 = vmatpush1.msra.mxu0 0.0
      %713 = vmatprep.subr.mxu0 0.0
      %714 = vmatpush1.msra.mxu0 0.0
      %715 = vmatprep.subr.mxu0 0.0
      %716 = vmatpush1.msra.mxu0 0.0
      %717 = vmatprep.subr.mxu0 0.0
      %718 = vmatpush1.msra.mxu0 0.0
      %719 = vmatprep.subr.mxu0 0.0
      %720 = vmatpush1.msra.mxu0 0.0
      %721 = vmatprep.subr.mxu0 0.0
      %722 = vmatpush1.msra.mxu0 0.0
      %723 = vmatprep.subr.mxu0 0.0
      %724 = vmatpush1.msra.mxu0 0.0
      %725 = vmatprep.subr.mxu0 0.0
      %726 = vmatpush1.msra.mxu0 0.0
      %727 = vmatprep.subr.mxu0 0.0
      %728 = vmatpush1.msra.mxu0 0.0
      %729 = vmatprep.subr.mxu0 0.0
      %730 = vmatpush1.msra.mxu0 0.0
      %731 = vmatprep.subr.mxu0 0.0
      %732 = vmatpush1.msra.mxu0 0.0
      %733 = vmatprep.subr.mxu0 0.0
      %734 = vmatpush1.msra.mxu0 0.0
      %735 = vmatprep.subr.mxu0 0.0
      %736 = vmatpush1.msra.mxu0 0.0
      %737 = vmatprep.subr.mxu0 0.0
      %738 = vmatpush1.msra.mxu0 0.0
      %739 = vmatprep.subr.mxu0 0.0
      %740 = vmatpush1.msra.mxu0 0.0
      %741 = vmatprep.subr.mxu0 0.0
      %742 = vmatpush1.msra.mxu0 0.0
      %743 = vmatprep.subr.mxu0 0.0
      %744 = vmatpush1.msra.mxu0 0.0
      %745 = vmatprep.subr.mxu0 0.0
      %746 = vmatpush1.msra.mxu0 0.0
      %747 = vmatprep.subr.mxu0 0.0
      %748 = vmatpush1.msra.mxu0 0.0
      %749 = vmatprep.subr.mxu0 0.0
      %750 = vmatpush1.msra.mxu0 0.0
      %751 = vmatprep.subr.mxu0 0.0
      %752 = vmatpush1.msra.mxu0 0.0
      %753 = vmatprep.subr.mxu0 0.0
      %754 = vmatpush1.msra.mxu0 0.0
      %755 = vmatprep.subr.mxu0 0.0
      %756 = vmatpush1.msra.mxu0 0.0
      %757 = vmatprep.subr.mxu0 0.0
      %758 = vmatpush1.msra.mxu0 0.0
      %759 = vmatprep.subr.mxu0 0.0
      %760 = vmatpush1.msra.mxu0 0.0
      %761 = vmatprep.subr.mxu0 0.0
      %762 = vmatpush1.msra.mxu0 0.0
      %763 = vmatprep.subr.mxu0 0.0
      %764 = vmatpush1.msra.mxu0 0.0
      %765 = vmatprep.mubr.f32.mxu0 0.0
      %766 = vmatmul.mubr.f32.gmra.mrb[0].mxu0 %v678
      %v767 = vpop.f32.mrb[0].mxu0
      %v768 = vadd.f32 0.0, %v767
      %v769 = vpop.f32.mrb[0].mxu0
      %770 = vmatprep.mubr.f32.mxu0 0.0
      %771 = vmatmul.mubr.f32.gmra.mrb[0].mxu0 %v681
      %v772 = vpop.f32.mrb[0].mxu0
      %v773 = vadd.f32 0.0, %v772
      %v774 = vpop.f32.mrb[0].mxu0
      %775 = vmatprep.mubr.f32.mxu0 0.0
      %776 = vmatmul.mubr.f32.gmra.mrb[0].mxu0 %v684
      %v777 = vpop.f32.mrb[0].mxu0
      %v778 = vadd.f32 0.0, %v777
      %v779 = vpop.f32.mrb[0].mxu0
      %780 = vmatprep.mubr.f32.mxu0 0.0
      %781 = vmatmul.mubr.f32.gmra.mrb[0].mxu0 %v687
      %v782 = vpop.f32.mrb[0].mxu0
      %v783 = vadd.f32 0.0, %v782
      %v784 = vpop.f32.mrb[0].mxu0
      %785 = vmatprep.mubr.f32.mxu0 0.0
      %786 = vmatmul.mubr.f32.gmra.mrb[0].mxu0 %v690
      %v787 = vpop.f32.mrb[0].mxu0
      %v788 = vadd.f32 0.0, %v787
      %v789 = vpop.f32.mrb[0].mxu0
      %790 = vmatprep.mubr.f32.mxu0 0.0
      %791 = vmatmul.mubr.f32.gmra.mrb[0].mxu0 %v693
      %v792 = vpop.f32.mrb[0].mxu0
      %v793 = vadd.f32 0.0, %v792
      %v794 = vpop.f32.mrb[0].mxu0
      %795 = vmatprep.mubr.f32.mxu0 0.0
      %796 = vmatmul.mubr.f32.gmra.mrb[0].mxu0 %v696
      %v797 = vpop.f32.mrb[0].mxu0
      %v798 = vadd.f32 0.0, %v797
      %v799 = vpop.f32.mrb[0].mxu0
      %800 = vmatprep.mubr.f32.mxu0 0.0
      %801 = vmatmul.mubr.f32.gmra.mrb[0].mxu0 %v699
      %v802 = vpop.f32.mrb[0].mxu0
      %v803 = vadd.f32 0.0, %v802
      %v804 = vpop.f32.mrb[0].mxu0
      %805 = vdwg.mxu0
      %vm806 = vcmask 523520
      %v807 = vsel %vm806, %v322, -inf
      %v808 = vsel %vm806, %v328, -inf
      %v809 = vsel %vm806, %v334, -inf
      %v810 = vsel %vm806, %v340, -inf
      %v811 = vsel %vm806, %v346, -inf
      %v812 = vmax.f32 %v807, %v811
      %v813 = vsel %vm806, %v352, -inf
      %v814 = vmax.f32 %v808, %v813
      %v815 = vsel %vm806, %v358, -inf
      %v816 = vmax.f32 %v809, %v815
      %v817 = vsel %vm806, %v364, -inf
      %v818 = vmax.f32 %v810, %v817
      %v819 = vmax.f32 %v812, %v814
      %v820 = vmax.f32 %v816, %v818
      %v821 = vmax.f32 %v819, %v820
      %v822 = vrot.slane %v821, 4
      %v823 = vmax.f32 %v821, %v822
      %v824 = vrot.slane %v823, 2
      %v825 = vmax.f32 %v823, %v824
      %v826 = vrot.slane %v825, 1
      %v827 = vmax.f32 %v825, %v826
      %v828 = vsub.f32 %v322, %v827
      %v829 = vsub.f32 %v328, %v827
      %v830 = vsub.f32 %v334, %v827
      %v831 = vsub.f32 %v340, %v827
      %v832 = vsub.f32 %v346, %v827
      %v833 = vsub.f32 %v352, %v827
      %v834 = vsub.f32 %v358, %v827
      %v835 = vsub.f32 %v364, %v827
      %v836 = vmul.f32 %v828, 1.442695
      %v837 = vpow.pop %v836
      %v838 = vmul.f32 %v829, 1.442695
      %v839 = vpow.pop %v838
      %v840 = vmul.f32 %v830, 1.442695
      %v841 = vpow.pop %v840
      %v842 = vmul.f32 %v831, 1.442695
      %v843 = vpow.pop %v842
      %v844 = vmul.f32 %v832, 1.442695
      %v845 = vpow.pop %v844
      %v846 = vmul.f32 %v833, 1.442695
      %v847 = vpow.pop %v846
      %v848 = vmul.f32 %v834, 1.442695
      %v849 = vpow.pop %v848
      %v850 = vmul.f32 %v835, 1.442695
      %v851 = vpow.pop %v850
      %v852 = vsel %vm806, %v837, 0.0
      %v853 = vsel %vm806, %v839, 0.0
      %v854 = vadd.f32 %v852, %v853
      %v855 = vsel %vm806, %v841, 0.0
      %v856 = vadd.f32 %v854, %v855
      %v857 = vsel %vm806, %v843, 0.0
      %v858 = vadd.f32 %v856, %v857
      %v859 = vsel %vm806, %v845, 0.0
      %v860 = vadd.f32 %v858, %v859
      %v861 = vsel %vm806, %v847, 0.0
      %v862 = vadd.f32 %v860, %v861
      %v863 = vsel %vm806, %v849, 0.0
      %v864 = vadd.f32 %v862, %v863
      %v865 = vsel %vm806, %v851, 0.0
      %v866 = vadd.f32 %v864, %v865
      %v867 = vrot.slane %v866, 4
      %v868 = vadd.f32 %v866, %v867
      %v869 = vrot.slane %v868, 2
      %v870 = vadd.f32 %v868, %v869
      %v871 = vrot.slane %v870, 1
      %v872 = vadd.f32 %v870, %v871
      %v873 = vrcp.pop %v872
      %v874 = vmul.f32 %v837, %v873
      %v875 = vmul.f32 %v839, %v873
      %v876 = vmul.f32 %v841, %v873
      %v877 = vmul.f32 %v843, %v873
      %v878 = vmul.f32 %v845, %v873
      %v879 = vmul.f32 %v847, %v873
      %v880 = vmul.f32 %v849, %v873
      %v881 = vmul.f32 %v851, %v873
      %890 = vrot.lane.b32.xlu0 %v874, 96
      %v891 = vpop.permute.xlu0 %890
      %892 = vrot.lane.b32.xlu0 %v875, 96
      %v893 = vpop.permute.xlu0 %892
      %894 = vrot.lane.b32.xlu0 %v876, 96
      %v895 = vpop.permute.xlu0 %894
      %896 = vrot.lane.b32.xlu0 %v877, 96
      %v897 = vpop.permute.xlu0 %896
      %898 = vrot.lane.b32.xlu0 %v878, 96
      %v899 = vpop.permute.xlu0 %898
      %900 = vrot.lane.b32.xlu0 %v879, 96
      %v901 = vpop.permute.xlu0 %900
      %902 = vrot.lane.b32.xlu0 %v880, 96
      %v903 = vpop.permute.xlu0 %902
      %904 = vrot.lane.b32.xlu0 %v881, 96
      %v905 = vpop.permute.xlu0 %904
      %914 = vxpose.xlu0.b32.start [1/16] %v891, 128
      %915 = vxpose.xlu0.b32.cont [2/16] %v893, 128
      %916 = vxpose.xlu0.b32.cont [3/16] %v895, 128
      %917 = vxpose.xlu0.b32.cont [4/16] %v897, 128
      %918 = vxpose.xlu0.b32.cont [5/16] %v899, 128
      %919 = vxpose.xlu0.b32.cont [6/16] %v901, 128
      %920 = vxpose.xlu0.b32.cont [7/16] %v903, 128
      %921 = vxpose.xlu0.b32.cont [8/16] %v905, 128
      %922 = vxpose.xlu0.b32.cont [9/16] 0.0, 128
      %923 = vxpose.xlu0.b32.cont [10/16] 0.0, 128
      %924 = vxpose.xlu0.b32.cont [11/16] 0.0, 128
      %925 = vxpose.xlu0.b32.cont [12/16] 0.0, 128
      %926 = vxpose.xlu0.b32.cont [13/16] 0.0, 128
      %927 = vxpose.xlu0.b32.cont [14/16] 0.0, 128
      %928 = vxpose.xlu0.b32.cont [15/16] 0.0, 128
      %929 = vxpose.xlu0.b32.end [16/16] 0.0, 128
      %v930 = vpop.trf.xlu0
      %v931 = vpop.trf.xlu0
      %v932 = vpop.trf.xlu0
      %v933 = vpop.trf.xlu0
      %v934 = vpop.trf.xlu0
      %v935 = vpop.trf.xlu0
      %v936 = vpop.trf.xlu0
      %v937 = vpop.trf.xlu0
      %v938 = vpop.trf.xlu0
      %v939 = vpop.trf.xlu0
      %v940 = vpop.trf.xlu0
      %v941 = vpop.trf.xlu0
      %v942 = vpop.trf.xlu0
      %v943 = vpop.trf.xlu0
      %v944 = vpop.trf.xlu0
      %v945 = vpop.trf.xlu0
      %954 = vrot.lane.b32.xlu0 %v433, 96
      %v955 = vpop.permute.xlu0 %954
      %956 = vrot.lane.b32.xlu0 %v438, 96
      %v957 = vpop.permute.xlu0 %956
      %958 = vrot.lane.b32.xlu0 %v443, 96
      %v959 = vpop.permute.xlu0 %958
      %960 = vrot.lane.b32.xlu0 %v448, 96
      %v961 = vpop.permute.xlu0 %960
      %962 = vrot.lane.b32.xlu0 %v453, 96
      %v963 = vpop.permute.xlu0 %962
      %964 = vrot.lane.b32.xlu0 %v458, 96
      %v965 = vpop.permute.xlu0 %964
      %966 = vrot.lane.b32.xlu0 %v463, 96
      %v967 = vpop.permute.xlu0 %966
      %968 = vrot.lane.b32.xlu0 %v468, 96
      %v969 = vpop.permute.xlu0 %968
      %v979 = vsel %vm579, %v930, 0
      %v982 = vsel %vm579, %v931, 0
      %v985 = vsel %vm579, %v932, 0
      %v988 = vsel %vm579, %v933, 0
      %990 = vmatprep.subr.mxu0 0.0
      %991 = vmatpush1.msra.mxu0 %v955
      %992 = vmatprep.subr.mxu0 0.0
      %993 = vmatpush1.msra.mxu0 %v957
      %994 = vmatprep.subr.mxu0 0.0
      %995 = vmatpush1.msra.mxu0 %v959
      %996 = vmatprep.subr.mxu0 0.0
      %997 = vmatpush1.msra.mxu0 %v961
      %998 = vmatprep.subr.mxu0 0.0
      %999 = vmatpush1.msra.mxu0 %v963
      %1000 = vmatprep.subr.mxu0 0.0
      %1001 = vmatpush1.msra.mxu0 %v965
      %1002 = vmatprep.subr.mxu0 0.0
      %1003 = vmatpush1.msra.mxu0 %v967
      %1004 = vmatprep.subr.mxu0 0.0
      %1005 = vmatpush1.msra.mxu0 %v969
      %1006 = vmatprep.subr.mxu0 0.0
      %1007 = vmatpush1.msra.mxu0 0.0
      %1008 = vmatprep.subr.mxu0 0.0
      %1009 = vmatpush1.msra.mxu0 0.0
      %1010 = vmatprep.subr.mxu0 0.0
      %1011 = vmatpush1.msra.mxu0 0.0
      %1012 = vmatprep.subr.mxu0 0.0
      %1013 = vmatpush1.msra.mxu0 0.0
      %1014 = vmatprep.subr.mxu0 0.0
      %1015 = vmatpush1.msra.mxu0 0.0
      %1016 = vmatprep.subr.mxu0 0.0
      %1017 = vmatpush1.msra.mxu0 0.0
      %1018 = vmatprep.subr.mxu0 0.0
      %1019 = vmatpush1.msra.mxu0 0.0
      %1020 = vmatprep.subr.mxu0 0.0
      %1021 = vmatpush1.msra.mxu0 0.0
      %1022 = vmatprep.subr.mxu0 0.0
      %1023 = vmatpush1.msra.mxu0 0.0
      %1024 = vmatprep.subr.mxu0 0.0
      %1025 = vmatpush1.msra.mxu0 0.0
      %1026 = vmatprep.subr.mxu0 0.0
      %1027 = vmatpush1.msra.mxu0 0.0
      %1028 = vmatprep.subr.mxu0 0.0
      %1029 = vmatpush1.msra.mxu0 0.0
      %1030 = vmatprep.subr.mxu0 0.0
      %1031 = vmatpush1.msra.mxu0 0.0
      %1032 = vmatprep.subr.mxu0 0.0
      %1033 = vmatpush1.msra.mxu0 0.0
      %1034 = vmatprep.subr.mxu0 0.0
      %1035 = vmatpush1.msra.mxu0 0.0
      %1036 = vmatprep.subr.mxu0 0.0
      %1037 = vmatpush1.msra.mxu0 0.0
      %1038 = vmatprep.subr.mxu0 0.0
      %1039 = vmatpush1.msra.mxu0 0.0
      %1040 = vmatprep.subr.mxu0 0.0
      %1041 = vmatpush1.msra.mxu0 0.0
      %1042 = vmatprep.subr.mxu0 0.0
      %1043 = vmatpush1.msra.mxu0 0.0
      %1044 = vmatprep.subr.mxu0 0.0
      %1045 = vmatpush1.msra.mxu0 0.0
      %1046 = vmatprep.subr.mxu0 0.0
      %1047 = vmatpush1.msra.mxu0 0.0
      %1048 = vmatprep.subr.mxu0 0.0
      %1049 = vmatpush1.msra.mxu0 0.0
      %1050 = vmatprep.subr.mxu0 0.0
      %1051 = vmatpush1.msra.mxu0 0.0
      %1052 = vmatprep.subr.mxu0 0.0
      %1053 = vmatpush1.msra.mxu0 0.0
      %1054 = vmatprep.mubr.f32.mxu0 0.0
      %1055 = vmatmul.mubr.f32.gmra.mrb[0].mxu0 %v979
      %v1056 = vpop.f32.mrb[0].mxu0
      %v1057 = vadd.f32 0.0, %v1056
      %v1058 = vpop.f32.mrb[0].mxu0
      %1059 = vmatprep.mubr.f32.mxu0 0.0
      %1060 = vmatmul.mubr.f32.gmra.mrb[0].mxu0 %v982
      %v1061 = vpop.f32.mrb[0].mxu0
      %v1062 = vadd.f32 0.0, %v1061
      %v1063 = vpop.f32.mrb[0].mxu0
      %1064 = vmatprep.mubr.f32.mxu0 0.0
      %1065 = vmatmul.mubr.f32.gmra.mrb[0].mxu0 %v985
      %v1066 = vpop.f32.mrb[0].mxu0
      %v1067 = vadd.f32 0.0, %v1066
      %v1068 = vpop.f32.mrb[0].mxu0
      %1069 = vmatprep.mubr.f32.mxu0 0.0
      %1070 = vmatmul.mubr.f32.gmra.mrb[0].mxu0 %v988
      %v1071 = vpop.f32.mrb[0].mxu0
      %v1072 = vadd.f32 0.0, %v1071
      %v1073 = vpop.f32.mrb[0].mxu0
      %1074 = vdwg.mxu0
      %1075 = vrot.lane.b32.xlu0 %v320, 96
      %v1076 = vpop.permute.xlu0 %1075
      %1077 = vrot.lane.b32.xlu0 %v326, 96
      %v1078 = vpop.permute.xlu0 %1077
      %1079 = vrot.lane.b32.xlu0 %v332, 96
      %v1080 = vpop.permute.xlu0 %1079
      %1081 = vrot.lane.b32.xlu0 %v338, 96
      %v1082 = vpop.permute.xlu0 %1081
      %1083 = vrot.lane.b32.xlu0 %v344, 96
      %v1084 = vpop.permute.xlu0 %1083
      %1085 = vrot.lane.b32.xlu0 %v350, 96
      %v1086 = vpop.permute.xlu0 %1085
      %1087 = vrot.lane.b32.xlu0 %v356, 96
      %v1088 = vpop.permute.xlu0 %1087
      %1089 = vrot.lane.b32.xlu0 %v362, 96
      %v1090 = vpop.permute.xlu0 %1089
      %v1091 = vsel %vm471, %v1076, 0
      %v1093 = vsel %vm471, %v1078, 0
      %v1095 = vsel %vm471, %v1080, 0
      %v1097 = vsel %vm471, %v1082, 0
      %v1099 = vsel %vm471, %v1084, 0
      %v1101 = vsel %vm471, %v1086, 0
      %v1103 = vsel %vm471, %v1088, 0
      %v1105 = vsel %vm471, %v1090, 0
      %1107 = vmatprep.subr.mxu0 0.0
      %1108 = vmatpush1.msra.mxu0 %v1057
      %1109 = vmatprep.subr.mxu0 0.0
      %1110 = vmatpush1.msra.mxu0 %v1062
      %1111 = vmatprep.subr.mxu0 0.0
      %1112 = vmatpush1.msra.mxu0 %v1067
      %1113 = vmatprep.subr.mxu0 0.0
      %1114 = vmatpush1.msra.mxu0 %v1072
      %1115 = vmatprep.subr.mxu0 0.0
      %1116 = vmatpush1.msra.mxu0 0.0
      %1117 = vmatprep.subr.mxu0 0.0
      %1118 = vmatpush1.msra.mxu0 0.0
      %1119 = vmatprep.subr.mxu0 0.0
      %1120 = vmatpush1.msra.mxu0 0.0
      %1121 = vmatprep.subr.mxu0 0.0
      %1122 = vmatpush1.msra.mxu0 0.0
      %1123 = vmatprep.subr.mxu0 0.0
      %1124 = vmatpush1.msra.mxu0 0.0
      %1125 = vmatprep.subr.mxu0 0.0
      %1126 = vmatpush1.msra.mxu0 0.0
      %1127 = vmatprep.subr.mxu0 0.0
      %1128 = vmatpush1.msra.mxu0 0.0
      %1129 = vmatprep.subr.mxu0 0.0
      %1130 = vmatpush1.msra.mxu0 0.0
      %1131 = vmatprep.subr.mxu0 0.0
      %1132 = vmatpush1.msra.mxu0 0.0
      %1133 = vmatprep.subr.mxu0 0.0
      %1134 = vmatpush1.msra.mxu0 0.0
      %1135 = vmatprep.subr.mxu0 0.0
      %1136 = vmatpush1.msra.mxu0 0.0
      %1137 = vmatprep.subr.mxu0 0.0
      %1138 = vmatpush1.msra.mxu0 0.0
      %1139 = vmatprep.subr.mxu0 0.0
      %1140 = vmatpush1.msra.mxu0 0.0
      %1141 = vmatprep.subr.mxu0 0.0
      %1142 = vmatpush1.msra.mxu0 0.0
      %1143 = vmatprep.subr.mxu0 0.0
      %1144 = vmatpush1.msra.mxu0 0.0
      %1145 = vmatprep.subr.mxu0 0.0
      %1146 = vmatpush1.msra.mxu0 0.0
      %1147 = vmatprep.subr.mxu0 0.0
      %1148 = vmatpush1.msra.mxu0 0.0
      %1149 = vmatprep.subr.mxu0 0.0
      %1150 = vmatpush1.msra.mxu0 0.0
      %1151 = vmatprep.subr.mxu0 0.0
      %1152 = vmatpush1.msra.mxu0 0.0
      %1153 = vmatprep.subr.mxu0 0.0
      %1154 = vmatpush1.msra.mxu0 0.0
      %1155 = vmatprep.subr.mxu0 0.0
      %1156 = vmatpush1.msra.mxu0 0.0
      %1157 = vmatprep.subr.mxu0 0.0
      %1158 = vmatpush1.msra.mxu0 0.0
      %1159 = vmatprep.subr.mxu0 0.0
      %1160 = vmatpush1.msra.mxu0 0.0
      %1161 = vmatprep.subr.mxu0 0.0
      %1162 = vmatpush1.msra.mxu0 0.0
      %1163 = vmatprep.subr.mxu0 0.0
      %1164 = vmatpush1.msra.mxu0 0.0
      %1165 = vmatprep.subr.mxu0 0.0
      %1166 = vmatpush1.msra.mxu0 0.0
      %1167 = vmatprep.subr.mxu0 0.0
      %1168 = vmatpush1.msra.mxu0 0.0
      %1169 = vmatprep.subr.mxu0 0.0
      %1170 = vmatpush1.msra.mxu0 0.0
      %1171 = vmatprep.mubr.f32.mxu0 0.0
      %1172 = vmatmul.mubr.f32.gmra.mrb[0].mxu0 %v1091
      %v1173 = vpop.f32.mrb[0].mxu0
      %v1174 = vadd.f32 0.0, %v1173
      %v1175 = vpop.f32.mrb[0].mxu0
      %1176 = vmatprep.mubr.f32.mxu0 0.0
      %1177 = vmatmul.mubr.f32.gmra.mrb[0].mxu0 %v1093
      %v1178 = vpop.f32.mrb[0].mxu0
      %v1179 = vadd.f32 0.0, %v1178
      %v1180 = vpop.f32.mrb[0].mxu0
      %1181 = vmatprep.mubr.f32.mxu0 0.0
      %1182 = vmatmul.mubr.f32.gmra.mrb[0].mxu0 %v1095
      %v1183 = vpop.f32.mrb[0].mxu0
      %v1184 = vadd.f32 0.0, %v1183
      %v1185 = vpop.f32.mrb[0].mxu0
      %1186 = vmatprep.mubr.f32.mxu0 0.0
      %1187 = vmatmul.mubr.f32.gmra.mrb[0].mxu0 %v1097
      %v1188 = vpop.f32.mrb[0].mxu0
      %v1189 = vadd.f32 0.0, %v1188
      %v1190 = vpop.f32.mrb[0].mxu0
      %1191 = vmatprep.mubr.f32.mxu0 0.0
      %1192 = vmatmul.mubr.f32.gmra.mrb[0].mxu0 %v1099
      %v1193 = vpop.f32.mrb[0].mxu0
      %v1194 = vadd.f32 0.0, %v1193
      %v1195 = vpop.f32.mrb[0].mxu0
      %1196 = vmatprep.mubr.f32.mxu0 0.0
      %1197 = vmatmul.mubr.f32.gmra.mrb[0].mxu0 %v1101
      %v1198 = vpop.f32.mrb[0].mxu0
      %v1199 = vadd.f32 0.0, %v1198
      %v1200 = vpop.f32.mrb[0].mxu0
      %1201 = vmatprep.mubr.f32.mxu0 0.0
      %1202 = vmatmul.mubr.f32.gmra.mrb[0].mxu0 %v1103
      %v1203 = vpop.f32.mrb[0].mxu0
      %v1204 = vadd.f32 0.0, %v1203
      %v1205 = vpop.f32.mrb[0].mxu0
      %1206 = vmatprep.mubr.f32.mxu0 0.0
      %1207 = vmatmul.mubr.f32.gmra.mrb[0].mxu0 %v1105
      %v1208 = vpop.f32.mrb[0].mxu0
      %v1209 = vadd.f32 0.0, %v1208
      %v1210 = vpop.f32.mrb[0].mxu0
      %1211 = vdwg.mxu0
      %v1213 = vsel %vm471, %v1174, 0
      %v1216 = vsel %vm471, %v1179, 0
      %v1219 = vsel %vm471, %v1184, 0
      %v1222 = vsel %vm471, %v1189, 0
      %v1225 = vsel %vm471, %v1194, 0
      %v1228 = vsel %vm471, %v1199, 0
      %v1231 = vsel %vm471, %v1204, 0
      %v1234 = vsel %vm471, %v1209, 0
      %1236 = vmatprep.subr.mxu0 0.0
      %1237 = vmatpush1.msra.mxu0 %v216
      %1238 = vmatprep.subr.mxu0 0.0
      %1239 = vmatpush1.msra.mxu0 %v217
      %1240 = vmatprep.subr.mxu0 0.0
      %1241 = vmatpush1.msra.mxu0 %v218
      %1242 = vmatprep.subr.mxu0 0.0
      %1243 = vmatpush1.msra.mxu0 %v219
      %1244 = vmatprep.subr.mxu0 0.0
      %1245 = vmatpush1.msra.mxu0 0.0
      %1246 = vmatprep.subr.mxu0 0.0
      %1247 = vmatpush1.msra.mxu0 0.0
      %1248 = vmatprep.subr.mxu0 0.0
      %1249 = vmatpush1.msra.mxu0 0.0
      %1250 = vmatprep.subr.mxu0 0.0
      %1251 = vmatpush1.msra.mxu0 0.0
      %1252 = vmatprep.subr.mxu0 0.0
      %1253 = vmatpush1.msra.mxu0 0.0
      %1254 = vmatprep.subr.mxu0 0.0
      %1255 = vmatpush1.msra.mxu0 0.0
      %1256 = vmatprep.subr.mxu0 0.0
      %1257 = vmatpush1.msra.mxu0 0.0
      %1258 = vmatprep.subr.mxu0 0.0
      %1259 = vmatpush1.msra.mxu0 0.0
      %1260 = vmatprep.subr.mxu0 0.0
      %1261 = vmatpush1.msra.mxu0 0.0
      %1262 = vmatprep.subr.mxu0 0.0
      %1263 = vmatpush1.msra.mxu0 0.0
      %1264 = vmatprep.subr.mxu0 0.0
      %1265 = vmatpush1.msra.mxu0 0.0
      %1266 = vmatprep.subr.mxu0 0.0
      %1267 = vmatpush1.msra.mxu0 0.0
      %1268 = vmatprep.subr.mxu0 0.0
      %1269 = vmatpush1.msra.mxu0 0.0
      %1270 = vmatprep.subr.mxu0 0.0
      %1271 = vmatpush1.msra.mxu0 0.0
      %1272 = vmatprep.subr.mxu0 0.0
      %1273 = vmatpush1.msra.mxu0 0.0
      %1274 = vmatprep.subr.mxu0 0.0
      %1275 = vmatpush1.msra.mxu0 0.0
      %1276 = vmatprep.subr.mxu0 0.0
      %1277 = vmatpush1.msra.mxu0 0.0
      %1278 = vmatprep.subr.mxu0 0.0
      %1279 = vmatpush1.msra.mxu0 0.0
      %1280 = vmatprep.subr.mxu0 0.0
      %1281 = vmatpush1.msra.mxu0 0.0
      %1282 = vmatprep.subr.mxu0 0.0
      %1283 = vmatpush1.msra.mxu0 0.0
      %1284 = vmatprep.subr.mxu0 0.0
      %1285 = vmatpush1.msra.mxu0 0.0
      %1286 = vmatprep.subr.mxu0 0.0
      %1287 = vmatpush1.msra.mxu0 0.0
      %1288 = vmatprep.subr.mxu0 0.0
      %1289 = vmatpush1.msra.mxu0 0.0
      %1290 = vmatprep.subr.mxu0 0.0
      %1291 = vmatpush1.msra.mxu0 0.0
      %1292 = vmatprep.subr.mxu0 0.0
      %1293 = vmatpush1.msra.mxu0 0.0
      %1294 = vmatprep.subr.mxu0 0.0
      %1295 = vmatpush1.msra.mxu0 0.0
      %1296 = vmatprep.subr.mxu0 0.0
      %1297 = vmatpush1.msra.mxu0 0.0
      %1298 = vmatprep.subr.mxu0 0.0
      %1299 = vmatpush1.msra.mxu0 0.0
      %1300 = vmatprep.mubr.f32.mxu0 0.0
      %1301 = vmatmul.mubr.f32.gmra.mrb[0].mxu0 %v1213
      %v1302 = vpop.f32.mrb[0].mxu0
      %v1303 = vadd.f32 0.0, %v1302
      %v1304 = vpop.f32.mrb[0].mxu0
      %1305 = vmatprep.mubr.f32.mxu0 0.0
      %1306 = vmatmul.mubr.f32.gmra.mrb[0].mxu0 %v1216
      %v1307 = vpop.f32.mrb[0].mxu0
      %v1308 = vadd.f32 0.0, %v1307
      %v1309 = vpop.f32.mrb[0].mxu0
      %1310 = vmatprep.mubr.f32.mxu0 0.0
      %1311 = vmatmul.mubr.f32.gmra.mrb[0].mxu0 %v1219
      %v1312 = vpop.f32.mrb[0].mxu0
      %v1313 = vadd.f32 0.0, %v1312
      %v1314 = vpop.f32.mrb[0].mxu0
      %1315 = vmatprep.mubr.f32.mxu0 0.0
      %1316 = vmatmul.mubr.f32.gmra.mrb[0].mxu0 %v1222
      %v1317 = vpop.f32.mrb[0].mxu0
      %v1318 = vadd.f32 0.0, %v1317
      %v1319 = vpop.f32.mrb[0].mxu0
      %1320 = vmatprep.mubr.f32.mxu0 0.0
      %1321 = vmatmul.mubr.f32.gmra.mrb[0].mxu0 %v1225
      %v1322 = vpop.f32.mrb[0].mxu0
      %v1323 = vadd.f32 0.0, %v1322
      %v1324 = vpop.f32.mrb[0].mxu0
      %1325 = vmatprep.mubr.f32.mxu0 0.0
      %1326 = vmatmul.mubr.f32.gmra.mrb[0].mxu0 %v1228
      %v1327 = vpop.f32.mrb[0].mxu0
      %v1328 = vadd.f32 0.0, %v1327
      %v1329 = vpop.f32.mrb[0].mxu0
      %1330 = vmatprep.mubr.f32.mxu0 0.0
      %1331 = vmatmul.mubr.f32.gmra.mrb[0].mxu0 %v1231
      %v1332 = vpop.f32.mrb[0].mxu0
      %v1333 = vadd.f32 0.0, %v1332
      %v1334 = vpop.f32.mrb[0].mxu0
      %1335 = vmatprep.mubr.f32.mxu0 0.0
      %1336 = vmatmul.mubr.f32.gmra.mrb[0].mxu0 %v1234
      %v1337 = vpop.f32.mrb[0].mxu0
      %v1338 = vadd.f32 0.0, %v1337
      %v1339 = vpop.f32.mrb[0].mxu0
      %1340 = vdwg.mxu0
      %v1342 = vsel %vm471, %v768, 0
      %v1345 = vsel %vm471, %v773, 0
      %v1348 = vsel %vm471, %v778, 0
      %v1351 = vsel %vm471, %v783, 0
      %v1354 = vsel %vm471, %v788, 0
      %v1357 = vsel %vm471, %v793, 0
      %v1360 = vsel %vm471, %v798, 0
      %v1363 = vsel %vm471, %v803, 0
      %1365 = vmatprep.subr.mxu0 0.0
      %1366 = vmatpush1.msra.mxu0 %v212
      %1367 = vmatprep.subr.mxu0 0.0
      %1368 = vmatpush1.msra.mxu0 %v213
      %1369 = vmatprep.subr.mxu0 0.0
      %1370 = vmatpush1.msra.mxu0 %v214
      %1371 = vmatprep.subr.mxu0 0.0
      %1372 = vmatpush1.msra.mxu0 %v215
      %1373 = vmatprep.subr.mxu0 0.0
      %1374 = vmatpush1.msra.mxu0 0.0
      %1375 = vmatprep.subr.mxu0 0.0
      %1376 = vmatpush1.msra.mxu0 0.0
      %1377 = vmatprep.subr.mxu0 0.0
      %1378 = vmatpush1.msra.mxu0 0.0
      %1379 = vmatprep.subr.mxu0 0.0
      %1380 = vmatpush1.msra.mxu0 0.0
      %1381 = vmatprep.subr.mxu0 0.0
      %1382 = vmatpush1.msra.mxu0 0.0
      %1383 = vmatprep.subr.mxu0 0.0
      %1384 = vmatpush1.msra.mxu0 0.0
      %1385 = vmatprep.subr.mxu0 0.0
      %1386 = vmatpush1.msra.mxu0 0.0
      %1387 = vmatprep.subr.mxu0 0.0
      %1388 = vmatpush1.msra.mxu0 0.0
      %1389 = vmatprep.subr.mxu0 0.0
      %1390 = vmatpush1.msra.mxu0 0.0
      %1391 = vmatprep.subr.mxu0 0.0
      %1392 = vmatpush1.msra.mxu0 0.0
      %1393 = vmatprep.subr.mxu0 0.0
      %1394 = vmatpush1.msra.mxu0 0.0
      %1395 = vmatprep.subr.mxu0 0.0
      %1396 = vmatpush1.msra.mxu0 0.0
      %1397 = vmatprep.subr.mxu0 0.0
      %1398 = vmatpush1.msra.mxu0 0.0
      %1399 = vmatprep.subr.mxu0 0.0
      %1400 = vmatpush1.msra.mxu0 0.0
      %1401 = vmatprep.subr.mxu0 0.0
      %1402 = vmatpush1.msra.mxu0 0.0
      %1403 = vmatprep.subr.mxu0 0.0
      %1404 = vmatpush1.msra.mxu0 0.0
      %1405 = vmatprep.subr.mxu0 0.0
      %1406 = vmatpush1.msra.mxu0 0.0
      %1407 = vmatprep.subr.mxu0 0.0
      %1408 = vmatpush1.msra.mxu0 0.0
      %1409 = vmatprep.subr.mxu0 0.0
      %1410 = vmatpush1.msra.mxu0 0.0
      %1411 = vmatprep.subr.mxu0 0.0
      %1412 = vmatpush1.msra.mxu0 0.0
      %1413 = vmatprep.subr.mxu0 0.0
      %1414 = vmatpush1.msra.mxu0 0.0
      %1415 = vmatprep.subr.mxu0 0.0
      %1416 = vmatpush1.msra.mxu0 0.0
      %1417 = vmatprep.subr.mxu0 0.0
      %1418 = vmatpush1.msra.mxu0 0.0
      %1419 = vmatprep.subr.mxu0 0.0
      %1420 = vmatpush1.msra.mxu0 0.0
      %1421 = vmatprep.subr.mxu0 0.0
      %1422 = vmatpush1.msra.mxu0 0.0
      %1423 = vmatprep.subr.mxu0 0.0
      %1424 = vmatpush1.msra.mxu0 0.0
      %1425 = vmatprep.subr.mxu0 0.0
      %1426 = vmatpush1.msra.mxu0 0.0
      %1427 = vmatprep.subr.mxu0 0.0
      %1428 = vmatpush1.msra.mxu0 0.0
      %1429 = vmatprep.mubr.f32.mxu0 0.0
      %1430 = vmatmul.mubr.f32.gmra.mrb[0].mxu0 %v1342
      %v1431 = vpop.f32.mrb[0].mxu0
      %v1432 = vadd.f32 %v1303, %v1431
      %v1433 = vpop.f32.mrb[0].mxu0
      %1434 = vmatprep.mubr.f32.mxu0 0.0
      %1435 = vmatmul.mubr.f32.gmra.mrb[0].mxu0 %v1345
      %v1436 = vpop.f32.mrb[0].mxu0
      %v1437 = vadd.f32 %v1308, %v1436
      %v1438 = vpop.f32.mrb[0].mxu0
      %1439 = vmatprep.mubr.f32.mxu0 0.0
      %1440 = vmatmul.mubr.f32.gmra.mrb[0].mxu0 %v1348
      %v1441 = vpop.f32.mrb[0].mxu0
      %v1442 = vadd.f32 %v1313, %v1441
      %v1443 = vpop.f32.mrb[0].mxu0
      %1444 = vmatprep.mubr.f32.mxu0 0.0
      %1445 = vmatmul.mubr.f32.gmra.mrb[0].mxu0 %v1351
      %v1446 = vpop.f32.mrb[0].mxu0
      %v1447 = vadd.f32 %v1318, %v1446
      %v1448 = vpop.f32.mrb[0].mxu0
      %1449 = vmatprep.mubr.f32.mxu0 0.0
      %1450 = vmatmul.mubr.f32.gmra.mrb[0].mxu0 %v1354
      %v1451 = vpop.f32.mrb[0].mxu0
      %v1452 = vadd.f32 %v1323, %v1451
      %v1453 = vpop.f32.mrb[0].mxu0
      %1454 = vmatprep.mubr.f32.mxu0 0.0
      %1455 = vmatmul.mubr.f32.gmra.mrb[0].mxu0 %v1357
      %v1456 = vpop.f32.mrb[0].mxu0
      %v1457 = vadd.f32 %v1328, %v1456
      %v1458 = vpop.f32.mrb[0].mxu0
      %1459 = vmatprep.mubr.f32.mxu0 0.0
      %1460 = vmatmul.mubr.f32.gmra.mrb[0].mxu0 %v1360
      %v1461 = vpop.f32.mrb[0].mxu0
      %v1462 = vadd.f32 %v1333, %v1461
      %v1463 = vpop.f32.mrb[0].mxu0
      %1464 = vmatprep.mubr.f32.mxu0 0.0
      %1465 = vmatmul.mubr.f32.gmra.mrb[0].mxu0 %v1363
      %v1466 = vpop.f32.mrb[0].mxu0
      %v1467 = vadd.f32 %v1338, %v1466
      %v1468 = vpop.f32.mrb[0].mxu0
      %1469 = vdwg.mxu0
      %vm1470 = vcmask 785920
      %v1471 = vsel %vm1470, %v322, -inf
      %v1472 = vsel %vm1470, %v328, -inf
      %v1473 = vsel %vm1470, %v334, -inf
      %v1474 = vsel %vm1470, %v340, -inf
      %v1475 = vsel %vm1470, %v346, -inf
      %v1476 = vmax.f32 %v1471, %v1475
      %v1477 = vsel %vm1470, %v352, -inf
      %v1478 = vmax.f32 %v1472, %v1477
      %v1479 = vsel %vm1470, %v358, -inf
      %v1480 = vmax.f32 %v1473, %v1479
      %v1481 = vsel %vm1470, %v364, -inf
      %v1482 = vmax.f32 %v1474, %v1481
      %v1483 = vmax.f32 %v1476, %v1478
      %v1484 = vmax.f32 %v1480, %v1482
      %v1485 = vmax.f32 %v1483, %v1484
      %v1486 = vrot.slane %v1485, 4
      %v1487 = vmax.f32 %v1485, %v1486
      %v1488 = vrot.slane %v1487, 2
      %v1489 = vmax.f32 %v1487, %v1488
      %v1490 = vrot.slane %v1489, 1
      %v1491 = vmax.f32 %v1489, %v1490
      %v1492 = vsub.f32 %v322, %v1491
      %v1493 = vsub.f32 %v328, %v1491
      %v1494 = vsub.f32 %v334, %v1491
      %v1495 = vsub.f32 %v340, %v1491
      %v1496 = vsub.f32 %v346, %v1491
      %v1497 = vsub.f32 %v352, %v1491
      %v1498 = vsub.f32 %v358, %v1491
      %v1499 = vsub.f32 %v364, %v1491
      %v1500 = vmul.f32 %v1492, 1.442695
      %v1501 = vpow.pop %v1500
      %v1502 = vmul.f32 %v1493, 1.442695
      %v1503 = vpow.pop %v1502
      %v1504 = vmul.f32 %v1494, 1.442695
      %v1505 = vpow.pop %v1504
      %v1506 = vmul.f32 %v1495, 1.442695
      %v1507 = vpow.pop %v1506
      %v1508 = vmul.f32 %v1496, 1.442695
      %v1509 = vpow.pop %v1508
      %v1510 = vmul.f32 %v1497, 1.442695
      %v1511 = vpow.pop %v1510
      %v1512 = vmul.f32 %v1498, 1.442695
      %v1513 = vpow.pop %v1512
      %v1514 = vmul.f32 %v1499, 1.442695
      %v1515 = vpow.pop %v1514
      %v1516 = vsel %vm1470, %v1501, 0.0
      %v1517 = vsel %vm1470, %v1503, 0.0
      %v1518 = vadd.f32 %v1516, %v1517
      %v1519 = vsel %vm1470, %v1505, 0.0
      %v1520 = vadd.f32 %v1518, %v1519
      %v1521 = vsel %vm1470, %v1507, 0.0
      %v1522 = vadd.f32 %v1520, %v1521
      %v1523 = vsel %vm1470, %v1509, 0.0
      %v1524 = vadd.f32 %v1522, %v1523
      %v1525 = vsel %vm1470, %v1511, 0.0
      %v1526 = vadd.f32 %v1524, %v1525
      %v1527 = vsel %vm1470, %v1513, 0.0
      %v1528 = vadd.f32 %v1526, %v1527
      %v1529 = vsel %vm1470, %v1515, 0.0
      %v1530 = vadd.f32 %v1528, %v1529
      %v1531 = vrot.slane %v1530, 4
      %v1532 = vadd.f32 %v1530, %v1531
      %v1533 = vrot.slane %v1532, 2
      %v1534 = vadd.f32 %v1532, %v1533
      %v1535 = vrot.slane %v1534, 1
      %v1536 = vadd.f32 %v1534, %v1535
      %v1537 = vrcp.pop %v1536
      %v1538 = vmul.f32 %v1501, %v1537
      %v1539 = vmul.f32 %v1503, %v1537
      %v1540 = vmul.f32 %v1505, %v1537
      %v1541 = vmul.f32 %v1507, %v1537
      %v1542 = vmul.f32 %v1509, %v1537
      %v1543 = vmul.f32 %v1511, %v1537
      %v1544 = vmul.f32 %v1513, %v1537
      %v1545 = vmul.f32 %v1515, %v1537
      %1554 = vrot.lane.b32.xlu0 %v1538, 64
      %v1555 = vpop.permute.xlu0 %1554
      %1556 = vrot.lane.b32.xlu0 %v1539, 64
      %v1557 = vpop.permute.xlu0 %1556
      %1558 = vrot.lane.b32.xlu0 %v1540, 64
      %v1559 = vpop.permute.xlu0 %1558
      %1560 = vrot.lane.b32.xlu0 %v1541, 64
      %v1561 = vpop.permute.xlu0 %1560
      %1562 = vrot.lane.b32.xlu0 %v1542, 64
      %v1563 = vpop.permute.xlu0 %1562
      %1564 = vrot.lane.b32.xlu0 %v1543, 64
      %v1565 = vpop.permute.xlu0 %1564
      %1566 = vrot.lane.b32.xlu0 %v1544, 64
      %v1567 = vpop.permute.xlu0 %1566
      %1568 = vrot.lane.b32.xlu0 %v1545, 64
      %v1569 = vpop.permute.xlu0 %1568
      %1578 = vxpose.xlu0.b32.start [1/16] %v1555, 128
      %1579 = vxpose.xlu0.b32.cont [2/16] %v1557, 128
      %1580 = vxpose.xlu0.b32.cont [3/16] %v1559, 128
      %1581 = vxpose.xlu0.b32.cont [4/16] %v1561, 128
      %1582 = vxpose.xlu0.b32.cont [5/16] %v1563, 128
      %1583 = vxpose.xlu0.b32.cont [6/16] %v1565, 128
      %1584 = vxpose.xlu0.b32.cont [7/16] %v1567, 128
      %1585 = vxpose.xlu0.b32.cont [8/16] %v1569, 128
      %1586 = vxpose.xlu0.b32.cont [9/16] 0.0, 128
      %1587 = vxpose.xlu0.b32.cont [10/16] 0.0, 128
      %1588 = vxpose.xlu0.b32.cont [11/16] 0.0, 128
      %1589 = vxpose.xlu0.b32.cont [12/16] 0.0, 128
      %1590 = vxpose.xlu0.b32.cont [13/16] 0.0, 128
      %1591 = vxpose.xlu0.b32.cont [14/16] 0.0, 128
      %1592 = vxpose.xlu0.b32.cont [15/16] 0.0, 128
      %1593 = vxpose.xlu0.b32.end [16/16] 0.0, 128
      %v1594 = vpop.trf.xlu0
      %v1595 = vpop.trf.xlu0
      %v1596 = vpop.trf.xlu0
      %v1597 = vpop.trf.xlu0
      %v1598 = vpop.trf.xlu0
      %v1599 = vpop.trf.xlu0
      %v1600 = vpop.trf.xlu0
      %v1601 = vpop.trf.xlu0
      %v1602 = vpop.trf.xlu0
      %v1603 = vpop.trf.xlu0
      %v1604 = vpop.trf.xlu0
      %v1605 = vpop.trf.xlu0
      %v1606 = vpop.trf.xlu0
      %v1607 = vpop.trf.xlu0
      %v1608 = vpop.trf.xlu0
      %v1609 = vpop.trf.xlu0
      %1610 = vrot.lane.b32.xlu0 %v433, 64
      %v1611 = vpop.permute.xlu0 %1610
      %1612 = vrot.lane.b32.xlu0 %v438, 64
      %v1613 = vpop.permute.xlu0 %1612
      %1614 = vrot.lane.b32.xlu0 %v443, 64
      %v1615 = vpop.permute.xlu0 %1614
      %1616 = vrot.lane.b32.xlu0 %v448, 64
      %v1617 = vpop.permute.xlu0 %1616
      %1618 = vrot.lane.b32.xlu0 %v453, 64
      %v1619 = vpop.permute.xlu0 %1618
      %1620 = vrot.lane.b32.xlu0 %v458, 64
      %v1621 = vpop.permute.xlu0 %1620
      %1622 = vrot.lane.b32.xlu0 %v463, 64
      %v1623 = vpop.permute.xlu0 %1622
      %1624 = vrot.lane.b32.xlu0 %v468, 64
      %v1625 = vpop.permute.xlu0 %1624
      %v1635 = vsel %vm579, %v1594, 0
      %v1638 = vsel %vm579, %v1595, 0
      %v1641 = vsel %vm579, %v1596, 0
      %v1644 = vsel %vm579, %v1597, 0
      %1646 = vmatprep.subr.mxu0 0.0
      %1647 = vmatpush1.msra.mxu0 %v1611
      %1648 = vmatprep.subr.mxu0 0.0
      %1649 = vmatpush1.msra.mxu0 %v1613
      %1650 = vmatprep.subr.mxu0 0.0
      %1651 = vmatpush1.msra.mxu0 %v1615
      %1652 = vmatprep.subr.mxu0 0.0
      %1653 = vmatpush1.msra.mxu0 %v1617
      %1654 = vmatprep.subr.mxu0 0.0
      %1655 = vmatpush1.msra.mxu0 %v1619
      %1656 = vmatprep.subr.mxu0 0.0
      %1657 = vmatpush1.msra.mxu0 %v1621
      %1658 = vmatprep.subr.mxu0 0.0
      %1659 = vmatpush1.msra.mxu0 %v1623
      %1660 = vmatprep.subr.mxu0 0.0
      %1661 = vmatpush1.msra.mxu0 %v1625
      %1662 = vmatprep.subr.mxu0 0.0
      %1663 = vmatpush1.msra.mxu0 0.0
      %1664 = vmatprep.subr.mxu0 0.0
      %1665 = vmatpush1.msra.mxu0 0.0
      %1666 = vmatprep.subr.mxu0 0.0
      %1667 = vmatpush1.msra.mxu0 0.0
      %1668 = vmatprep.subr.mxu0 0.0
      %1669 = vmatpush1.msra.mxu0 0.0
      %1670 = vmatprep.subr.mxu0 0.0
      %1671 = vmatpush1.msra.mxu0 0.0
      %1672 = vmatprep.subr.mxu0 0.0
      %1673 = vmatpush1.msra.mxu0 0.0
      %1674 = vmatprep.subr.mxu0 0.0
      %1675 = vmatpush1.msra.mxu0 0.0
      %1676 = vmatprep.subr.mxu0 0.0
      %1677 = vmatpush1.msra.mxu0 0.0
      %1678 = vmatprep.subr.mxu0 0.0
      %1679 = vmatpush1.msra.mxu0 0.0
      %1680 = vmatprep.subr.mxu0 0.0
      %1681 = vmatpush1.msra.mxu0 0.0
      %1682 = vmatprep.subr.mxu0 0.0
      %1683 = vmatpush1.msra.mxu0 0.0
      %1684 = vmatprep.subr.mxu0 0.0
      %1685 = vmatpush1.msra.mxu0 0.0
      %1686 = vmatprep.subr.mxu0 0.0
      %1687 = vmatpush1.msra.mxu0 0.0
      %1688 = vmatprep.subr.mxu0 0.0
      %1689 = vmatpush1.msra.mxu0 0.0
      %1690 = vmatprep.subr.mxu0 0.0
      %1691 = vmatpush1.msra.mxu0 0.0
      %1692 = vmatprep.subr.mxu0 0.0
      %1693 = vmatpush1.msra.mxu0 0.0
      %1694 = vmatprep.subr.mxu0 0.0
      %1695 = vmatpush1.msra.mxu0 0.0
      %1696 = vmatprep.subr.mxu0 0.0
      %1697 = vmatpush1.msra.mxu0 0.0
      %1698 = vmatprep.subr.mxu0 0.0
      %1699 = vmatpush1.msra.mxu0 0.0
      %1700 = vmatprep.subr.mxu0 0.0
      %1701 = vmatpush1.msra.mxu0 0.0
      %1702 = vmatprep.subr.mxu0 0.0
      %1703 = vmatpush1.msra.mxu0 0.0
      %1704 = vmatprep.subr.mxu0 0.0
      %1705 = vmatpush1.msra.mxu0 0.0
      %1706 = vmatprep.subr.mxu0 0.0
      %1707 = vmatpush1.msra.mxu0 0.0
      %1708 = vmatprep.subr.mxu0 0.0
      %1709 = vmatpush1.msra.mxu0 0.0
      %1710 = vmatprep.mubr.f32.mxu0 0.0
      %1711 = vmatmul.mubr.f32.gmra.mrb[0].mxu0 %v1635
      %v1712 = vpop.f32.mrb[0].mxu0
      %v1713 = vadd.f32 0.0, %v1712
      %v1714 = vpop.f32.mrb[0].mxu0
      %1715 = vmatprep.mubr.f32.mxu0 0.0
      %1716 = vmatmul.mubr.f32.gmra.mrb[0].mxu0 %v1638
      %v1717 = vpop.f32.mrb[0].mxu0
      %v1718 = vadd.f32 0.0, %v1717
      %v1719 = vpop.f32.mrb[0].mxu0
      %1720 = vmatprep.mubr.f32.mxu0 0.0
      %1721 = vmatmul.mubr.f32.gmra.mrb[0].mxu0 %v1641
      %v1722 = vpop.f32.mrb[0].mxu0
      %v1723 = vadd.f32 0.0, %v1722
      %v1724 = vpop.f32.mrb[0].mxu0
      %1725 = vmatprep.mubr.f32.mxu0 0.0
      %1726 = vmatmul.mubr.f32.gmra.mrb[0].mxu0 %v1644
      %v1727 = vpop.f32.mrb[0].mxu0
      %v1728 = vadd.f32 0.0, %v1727
      %v1729 = vpop.f32.mrb[0].mxu0
      %1730 = vdwg.mxu0
      %1731 = vrot.lane.b32.xlu0 %v320, 64
      %v1732 = vpop.permute.xlu0 %1731
      %1733 = vrot.lane.b32.xlu0 %v326, 64
      %v1734 = vpop.permute.xlu0 %1733
      %1735 = vrot.lane.b32.xlu0 %v332, 64
      %v1736 = vpop.permute.xlu0 %1735
      %1737 = vrot.lane.b32.xlu0 %v338, 64
      %v1738 = vpop.permute.xlu0 %1737
      %1739 = vrot.lane.b32.xlu0 %v344, 64
      %v1740 = vpop.permute.xlu0 %1739
      %1741 = vrot.lane.b32.xlu0 %v350, 64
      %v1742 = vpop.permute.xlu0 %1741
      %1743 = vrot.lane.b32.xlu0 %v356, 64
      %v1744 = vpop.permute.xlu0 %1743
      %1745 = vrot.lane.b32.xlu0 %v362, 64
      %v1746 = vpop.permute.xlu0 %1745
      %v1747 = vsel %vm471, %v1732, 0
      %v1749 = vsel %vm471, %v1734, 0
      %v1751 = vsel %vm471, %v1736, 0
      %v1753 = vsel %vm471, %v1738, 0
      %v1755 = vsel %vm471, %v1740, 0
      %v1757 = vsel %vm471, %v1742, 0
      %v1759 = vsel %vm471, %v1744, 0
      %v1761 = vsel %vm471, %v1746, 0
      %1763 = vmatprep.subr.mxu0 0.0
      %1764 = vmatpush1.msra.mxu0 %v1713
      %1765 = vmatprep.subr.mxu0 0.0
      %1766 = vmatpush1.msra.mxu0 %v1718
      %1767 = vmatprep.subr.mxu0 0.0
      %1768 = vmatpush1.msra.mxu0 %v1723
      %1769 = vmatprep.subr.mxu0 0.0
      %1770 = vmatpush1.msra.mxu0 %v1728
      %1771 = vmatprep.subr.mxu0 0.0
      %1772 = vmatpush1.msra.mxu0 0.0
      %1773 = vmatprep.subr.mxu0 0.0
      %1774 = vmatpush1.msra.mxu0 0.0
      %1775 = vmatprep.subr.mxu0 0.0
      %1776 = vmatpush1.msra.mxu0 0.0
      %1777 = vmatprep.subr.mxu0 0.0
      %1778 = vmatpush1.msra.mxu0 0.0
      %1779 = vmatprep.subr.mxu0 0.0
      %1780 = vmatpush1.msra.mxu0 0.0
      %1781 = vmatprep.subr.mxu0 0.0
      %1782 = vmatpush1.msra.mxu0 0.0
      %1783 = vmatprep.subr.mxu0 0.0
      %1784 = vmatpush1.msra.mxu0 0.0
      %1785 = vmatprep.subr.mxu0 0.0
      %1786 = vmatpush1.msra.mxu0 0.0
      %1787 = vmatprep.subr.mxu0 0.0
      %1788 = vmatpush1.msra.mxu0 0.0
      %1789 = vmatprep.subr.mxu0 0.0
      %1790 = vmatpush1.msra.mxu0 0.0
      %1791 = vmatprep.subr.mxu0 0.0
      %1792 = vmatpush1.msra.mxu0 0.0
      %1793 = vmatprep.subr.mxu0 0.0
      %1794 = vmatpush1.msra.mxu0 0.0
      %1795 = vmatprep.subr.mxu0 0.0
      %1796 = vmatpush1.msra.mxu0 0.0
      %1797 = vmatprep.subr.mxu0 0.0
      %1798 = vmatpush1.msra.mxu0 0.0
      %1799 = vmatprep.subr.mxu0 0.0
      %1800 = vmatpush1.msra.mxu0 0.0
      %1801 = vmatprep.subr.mxu0 0.0
      %1802 = vmatpush1.msra.mxu0 0.0
      %1803 = vmatprep.subr.mxu0 0.0
      %1804 = vmatpush1.msra.mxu0 0.0
      %1805 = vmatprep.subr.mxu0 0.0
      %1806 = vmatpush1.msra.mxu0 0.0
      %1807 = vmatprep.subr.mxu0 0.0
      %1808 = vmatpush1.msra.mxu0 0.0
      %1809 = vmatprep.subr.mxu0 0.0
      %1810 = vmatpush1.msra.mxu0 0.0
      %1811 = vmatprep.subr.mxu0 0.0
      %1812 = vmatpush1.msra.mxu0 0.0
      %1813 = vmatprep.subr.mxu0 0.0
      %1814 = vmatpush1.msra.mxu0 0.0
      %1815 = vmatprep.subr.mxu0 0.0
      %1816 = vmatpush1.msra.mxu0 0.0
      %1817 = vmatprep.subr.mxu0 0.0
      %1818 = vmatpush1.msra.mxu0 0.0
      %1819 = vmatprep.subr.mxu0 0.0
      %1820 = vmatpush1.msra.mxu0 0.0
      %1821 = vmatprep.subr.mxu0 0.0
      %1822 = vmatpush1.msra.mxu0 0.0
      %1823 = vmatprep.subr.mxu0 0.0
      %1824 = vmatpush1.msra.mxu0 0.0
      %1825 = vmatprep.subr.mxu0 0.0
      %1826 = vmatpush1.msra.mxu0 0.0
      %1827 = vmatprep.mubr.f32.mxu0 0.0
      %1828 = vmatmul.mubr.f32.gmra.mrb[0].mxu0 %v1747
      %v1829 = vpop.f32.mrb[0].mxu0
      %v1830 = vadd.f32 0.0, %v1829
      %v1831 = vpop.f32.mrb[0].mxu0
      %1832 = vmatprep.mubr.f32.mxu0 0.0
      %1833 = vmatmul.mubr.f32.gmra.mrb[0].mxu0 %v1749
      %v1834 = vpop.f32.mrb[0].mxu0
      %v1835 = vadd.f32 0.0, %v1834
      %v1836 = vpop.f32.mrb[0].mxu0
      %1837 = vmatprep.mubr.f32.mxu0 0.0
      %1838 = vmatmul.mubr.f32.gmra.mrb[0].mxu0 %v1751
      %v1839 = vpop.f32.mrb[0].mxu0
      %v1840 = vadd.f32 0.0, %v1839
      %v1841 = vpop.f32.mrb[0].mxu0
      %1842 = vmatprep.mubr.f32.mxu0 0.0
      %1843 = vmatmul.mubr.f32.gmra.mrb[0].mxu0 %v1753
      %v1844 = vpop.f32.mrb[0].mxu0
      %v1845 = vadd.f32 0.0, %v1844
      %v1846 = vpop.f32.mrb[0].mxu0
      %1847 = vmatprep.mubr.f32.mxu0 0.0
      %1848 = vmatmul.mubr.f32.gmra.mrb[0].mxu0 %v1755
      %v1849 = vpop.f32.mrb[0].mxu0
      %v1850 = vadd.f32 0.0, %v1849
      %v1851 = vpop.f32.mrb[0].mxu0
      %1852 = vmatprep.mubr.f32.mxu0 0.0
      %1853 = vmatmul.mubr.f32.gmra.mrb[0].mxu0 %v1757
      %v1854 = vpop.f32.mrb[0].mxu0
      %v1855 = vadd.f32 0.0, %v1854
      %v1856 = vpop.f32.mrb[0].mxu0
      %1857 = vmatprep.mubr.f32.mxu0 0.0
      %1858 = vmatmul.mubr.f32.gmra.mrb[0].mxu0 %v1759
      %v1859 = vpop.f32.mrb[0].mxu0
      %v1860 = vadd.f32 0.0, %v1859
      %v1861 = vpop.f32.mrb[0].mxu0
      %1862 = vmatprep.mubr.f32.mxu0 0.0
      %1863 = vmatmul.mubr.f32.gmra.mrb[0].mxu0 %v1761
      %v1864 = vpop.f32.mrb[0].mxu0
      %v1865 = vadd.f32 0.0, %v1864
      %v1866 = vpop.f32.mrb[0].mxu0
      %1867 = vdwg.mxu0
      %v1869 = vsel %vm471, %v1830, 0
      %v1872 = vsel %vm471, %v1835, 0
      %v1875 = vsel %vm471, %v1840, 0
      %v1878 = vsel %vm471, %v1845, 0
      %v1881 = vsel %vm471, %v1850, 0
      %v1884 = vsel %vm471, %v1855, 0
      %v1887 = vsel %vm471, %v1860, 0
      %v1890 = vsel %vm471, %v1865, 0
      %1892 = vmatprep.subr.mxu0 0.0
      %1893 = vmatpush1.msra.mxu0 %v220
      %1894 = vmatprep.subr.mxu0 0.0
      %1895 = vmatpush1.msra.mxu0 %v221
      %1896 = vmatprep.subr.mxu0 0.0
      %1897 = vmatpush1.msra.mxu0 %v222
      %1898 = vmatprep.subr.mxu0 0.0
      %1899 = vmatpush1.msra.mxu0 %v223
      %1900 = vmatprep.subr.mxu0 0.0
      %1901 = vmatpush1.msra.mxu0 0.0
      %1902 = vmatprep.subr.mxu0 0.0
      %1903 = vmatpush1.msra.mxu0 0.0
      %1904 = vmatprep.subr.mxu0 0.0
      %1905 = vmatpush1.msra.mxu0 0.0
      %1906 = vmatprep.subr.mxu0 0.0
      %1907 = vmatpush1.msra.mxu0 0.0
      %1908 = vmatprep.subr.mxu0 0.0
      %1909 = vmatpush1.msra.mxu0 0.0
      %1910 = vmatprep.subr.mxu0 0.0
      %1911 = vmatpush1.msra.mxu0 0.0
      %1912 = vmatprep.subr.mxu0 0.0
      %1913 = vmatpush1.msra.mxu0 0.0
      %1914 = vmatprep.subr.mxu0 0.0
      %1915 = vmatpush1.msra.mxu0 0.0
      %1916 = vmatprep.subr.mxu0 0.0
      %1917 = vmatpush1.msra.mxu0 0.0
      %1918 = vmatprep.subr.mxu0 0.0
      %1919 = vmatpush1.msra.mxu0 0.0
      %1920 = vmatprep.subr.mxu0 0.0
      %1921 = vmatpush1.msra.mxu0 0.0
      %1922 = vmatprep.subr.mxu0 0.0
      %1923 = vmatpush1.msra.mxu0 0.0
      %1924 = vmatprep.subr.mxu0 0.0
      %1925 = vmatpush1.msra.mxu0 0.0
      %1926 = vmatprep.subr.mxu0 0.0
      %1927 = vmatpush1.msra.mxu0 0.0
      %1928 = vmatprep.subr.mxu0 0.0
      %1929 = vmatpush1.msra.mxu0 0.0
      %1930 = vmatprep.subr.mxu0 0.0
      %1931 = vmatpush1.msra.mxu0 0.0
      %1932 = vmatprep.subr.mxu0 0.0
      %1933 = vmatpush1.msra.mxu0 0.0
      %1934 = vmatprep.subr.mxu0 0.0
      %1935 = vmatpush1.msra.mxu0 0.0
      %1936 = vmatprep.subr.mxu0 0.0
      %1937 = vmatpush1.msra.mxu0 0.0
      %1938 = vmatprep.subr.mxu0 0.0
      %1939 = vmatpush1.msra.mxu0 0.0
      %1940 = vmatprep.subr.mxu0 0.0
      %1941 = vmatpush1.msra.mxu0 0.0
      %1942 = vmatprep.subr.mxu0 0.0
      %1943 = vmatpush1.msra.mxu0 0.0
      %1944 = vmatprep.subr.mxu0 0.0
      %1945 = vmatpush1.msra.mxu0 0.0
      %1946 = vmatprep.subr.mxu0 0.0
      %1947 = vmatpush1.msra.mxu0 0.0
      %1948 = vmatprep.subr.mxu0 0.0
      %1949 = vmatpush1.msra.mxu0 0.0
      %1950 = vmatprep.subr.mxu0 0.0
      %1951 = vmatpush1.msra.mxu0 0.0
      %1952 = vmatprep.subr.mxu0 0.0
      %1953 = vmatpush1.msra.mxu0 0.0
      %1954 = vmatprep.subr.mxu0 0.0
      %1955 = vmatpush1.msra.mxu0 0.0
      %1956 = vmatprep.mubr.f32.mxu0 0.0
      %1957 = vmatmul.mubr.f32.gmra.mrb[0].mxu0 %v1869
      %v1958 = vpop.f32.mrb[0].mxu0
      %v1959 = vadd.f32 0.0, %v1958
      %v1960 = vpop.f32.mrb[0].mxu0
      %1961 = vmatprep.mubr.f32.mxu0 0.0
      %1962 = vmatmul.mubr.f32.gmra.mrb[0].mxu0 %v1872
      %v1963 = vpop.f32.mrb[0].mxu0
      %v1964 = vadd.f32 0.0, %v1963
      %v1965 = vpop.f32.mrb[0].mxu0
      %1966 = vmatprep.mubr.f32.mxu0 0.0
      %1967 = vmatmul.mubr.f32.gmra.mrb[0].mxu0 %v1875
      %v1968 = vpop.f32.mrb[0].mxu0
      %v1969 = vadd.f32 0.0, %v1968
      %v1970 = vpop.f32.mrb[0].mxu0
      %1971 = vmatprep.mubr.f32.mxu0 0.0
      %1972 = vmatmul.mubr.f32.gmra.mrb[0].mxu0 %v1878
      %v1973 = vpop.f32.mrb[0].mxu0
      %v1974 = vadd.f32 0.0, %v1973
      %v1975 = vpop.f32.mrb[0].mxu0
      %1976 = vmatprep.mubr.f32.mxu0 0.0
      %1977 = vmatmul.mubr.f32.gmra.mrb[0].mxu0 %v1881
      %v1978 = vpop.f32.mrb[0].mxu0
      %v1979 = vadd.f32 0.0, %v1978
      %v1980 = vpop.f32.mrb[0].mxu0
      %1981 = vmatprep.mubr.f32.mxu0 0.0
      %1982 = vmatmul.mubr.f32.gmra.mrb[0].mxu0 %v1884
      %v1983 = vpop.f32.mrb[0].mxu0
      %v1984 = vadd.f32 0.0, %v1983
      %v1985 = vpop.f32.mrb[0].mxu0
      %1986 = vmatprep.mubr.f32.mxu0 0.0
      %1987 = vmatmul.mubr.f32.gmra.mrb[0].mxu0 %v1887
      %v1988 = vpop.f32.mrb[0].mxu0
      %v1989 = vadd.f32 0.0, %v1988
      %v1990 = vpop.f32.mrb[0].mxu0
      %1991 = vmatprep.mubr.f32.mxu0 0.0
      %1992 = vmatmul.mubr.f32.gmra.mrb[0].mxu0 %v1890
      %v1993 = vpop.f32.mrb[0].mxu0
      %v1994 = vadd.f32 0.0, %v1993
      %v1995 = vpop.f32.mrb[0].mxu0
      %1996 = vdwg.mxu0
      %v1997 = vadd.f32 %v1432, %v1959
      %v1998 = vadd.f32 %v1437, %v1964
      %v1999 = vadd.f32 %v1442, %v1969
      %v2000 = vadd.f32 %v1447, %v1974
      %v2001 = vadd.f32 %v1452, %v1979
      %v2002 = vadd.f32 %v1457, %v1984
      %v2003 = vadd.f32 %v1462, %v1989
      %v2004 = vadd.f32 %v1467, %v1994
      %vm2005 = vcmask 1048320
      %v2006 = vsel %vm2005, %v322, -inf
      %v2007 = vsel %vm2005, %v328, -inf
      %v2008 = vsel %vm2005, %v334, -inf
      %v2009 = vsel %vm2005, %v340, -inf
      %v2010 = vsel %vm2005, %v346, -inf
      %v2011 = vmax.f32 %v2006, %v2010
      %v2012 = vsel %vm2005, %v352, -inf
      %v2013 = vmax.f32 %v2007, %v2012
      %v2014 = vsel %vm2005, %v358, -inf
      %v2015 = vmax.f32 %v2008, %v2014
      %v2016 = vsel %vm2005, %v364, -inf
      %v2017 = vmax.f32 %v2009, %v2016
      %v2018 = vmax.f32 %v2011, %v2013
      %v2019 = vmax.f32 %v2015, %v2017
      %v2020 = vmax.f32 %v2018, %v2019
      %v2021 = vrot.slane %v2020, 4
      %v2022 = vmax.f32 %v2020, %v2021
      %v2023 = vrot.slane %v2022, 2
      %v2024 = vmax.f32 %v2022, %v2023
      %v2025 = vrot.slane %v2024, 1
      %v2026 = vmax.f32 %v2024, %v2025
      %v2027 = vsub.f32 %v322, %v2026
      %v2028 = vsub.f32 %v328, %v2026
      %v2029 = vsub.f32 %v334, %v2026
      %v2030 = vsub.f32 %v340, %v2026
      %v2031 = vsub.f32 %v346, %v2026
      %v2032 = vsub.f32 %v352, %v2026
      %v2033 = vsub.f32 %v358, %v2026
      %v2034 = vsub.f32 %v364, %v2026
      %v2035 = vmul.f32 %v2027, 1.442695
      %v2036 = vpow.pop %v2035
      %v2037 = vmul.f32 %v2028, 1.442695
      %v2038 = vpow.pop %v2037
      %v2039 = vmul.f32 %v2029, 1.442695
      %v2040 = vpow.pop %v2039
      %v2041 = vmul.f32 %v2030, 1.442695
      %v2042 = vpow.pop %v2041
      %v2043 = vmul.f32 %v2031, 1.442695
      %v2044 = vpow.pop %v2043
      %v2045 = vmul.f32 %v2032, 1.442695
      %v2046 = vpow.pop %v2045
      %v2047 = vmul.f32 %v2033, 1.442695
      %v2048 = vpow.pop %v2047
      %v2049 = vmul.f32 %v2034, 1.442695
      %v2050 = vpow.pop %v2049
      %v2051 = vsel %vm2005, %v2036, 0.0
      %v2052 = vsel %vm2005, %v2038, 0.0
      %v2053 = vadd.f32 %v2051, %v2052
      %v2054 = vsel %vm2005, %v2040, 0.0
      %v2055 = vadd.f32 %v2053, %v2054
      %v2056 = vsel %vm2005, %v2042, 0.0
      %v2057 = vadd.f32 %v2055, %v2056
      %v2058 = vsel %vm2005, %v2044, 0.0
      %v2059 = vadd.f32 %v2057, %v2058
      %v2060 = vsel %vm2005, %v2046, 0.0
      %v2061 = vadd.f32 %v2059, %v2060
      %v2062 = vsel %vm2005, %v2048, 0.0
      %v2063 = vadd.f32 %v2061, %v2062
      %v2064 = vsel %vm2005, %v2050, 0.0
      %v2065 = vadd.f32 %v2063, %v2064
      %v2066 = vrot.slane %v2065, 4
      %v2067 = vadd.f32 %v2065, %v2066
      %v2068 = vrot.slane %v2067, 2
      %v2069 = vadd.f32 %v2067, %v2068
      %v2070 = vrot.slane %v2069, 1
      %v2071 = vadd.f32 %v2069, %v2070
      %v2072 = vrcp.pop %v2071
      %v2073 = vmul.f32 %v2036, %v2072
      %v2074 = vmul.f32 %v2038, %v2072
      %v2075 = vmul.f32 %v2040, %v2072
      %v2076 = vmul.f32 %v2042, %v2072
      %v2077 = vmul.f32 %v2044, %v2072
      %v2078 = vmul.f32 %v2046, %v2072
      %v2079 = vmul.f32 %v2048, %v2072
      %v2080 = vmul.f32 %v2050, %v2072
      %2089 = vrot.lane.b32.xlu0 %v2073, 32
      %v2090 = vpop.permute.xlu0 %2089
      %2091 = vrot.lane.b32.xlu0 %v2074, 32
      %v2092 = vpop.permute.xlu0 %2091
      %2093 = vrot.lane.b32.xlu0 %v2075, 32
      %v2094 = vpop.permute.xlu0 %2093
      %2095 = vrot.lane.b32.xlu0 %v2076, 32
      %v2096 = vpop.permute.xlu0 %2095
      %2097 = vrot.lane.b32.xlu0 %v2077, 32
      %v2098 = vpop.permute.xlu0 %2097
      %2099 = vrot.lane.b32.xlu0 %v2078, 32
      %v2100 = vpop.permute.xlu0 %2099
      %2101 = vrot.lane.b32.xlu0 %v2079, 32
      %v2102 = vpop.permute.xlu0 %2101
      %2103 = vrot.lane.b32.xlu0 %v2080, 32
      %v2104 = vpop.permute.xlu0 %2103
      %2113 = vxpose.xlu0.b32.start [1/16] %v2090, 128
      %2114 = vxpose.xlu0.b32.cont [2/16] %v2092, 128
      %2115 = vxpose.xlu0.b32.cont [3/16] %v2094, 128
      %2116 = vxpose.xlu0.b32.cont [4/16] %v2096, 128
      %2117 = vxpose.xlu0.b32.cont [5/16] %v2098, 128
      %2118 = vxpose.xlu0.b32.cont [6/16] %v2100, 128
      %2119 = vxpose.xlu0.b32.cont [7/16] %v2102, 128
      %2120 = vxpose.xlu0.b32.cont [8/16] %v2104, 128
      %2121 = vxpose.xlu0.b32.cont [9/16] 0.0, 128
      %2122 = vxpose.xlu0.b32.cont [10/16] 0.0, 128
      %2123 = vxpose.xlu0.b32.cont [11/16] 0.0, 128
      %2124 = vxpose.xlu0.b32.cont [12/16] 0.0, 128
      %2125 = vxpose.xlu0.b32.cont [13/16] 0.0, 128
      %2126 = vxpose.xlu0.b32.cont [14/16] 0.0, 128
      %2127 = vxpose.xlu0.b32.cont [15/16] 0.0, 128
      %2128 = vxpose.xlu0.b32.end [16/16] 0.0, 128
      %v2129 = vpop.trf.xlu0
      %v2130 = vpop.trf.xlu0
      %v2131 = vpop.trf.xlu0
      %v2132 = vpop.trf.xlu0
      %v2133 = vpop.trf.xlu0
      %v2134 = vpop.trf.xlu0
      %v2135 = vpop.trf.xlu0
      %v2136 = vpop.trf.xlu0
      %v2137 = vpop.trf.xlu0
      %v2138 = vpop.trf.xlu0
      %v2139 = vpop.trf.xlu0
      %v2140 = vpop.trf.xlu0
      %v2141 = vpop.trf.xlu0
      %v2142 = vpop.trf.xlu0
      %v2143 = vpop.trf.xlu0
      %v2144 = vpop.trf.xlu0
      %2145 = vrot.lane.b32.xlu0 %v433, 32
      %v2146 = vpop.permute.xlu0 %2145
      %2147 = vrot.lane.b32.xlu0 %v438, 32
      %v2148 = vpop.permute.xlu0 %2147
      %2149 = vrot.lane.b32.xlu0 %v443, 32
      %v2150 = vpop.permute.xlu0 %2149
      %2151 = vrot.lane.b32.xlu0 %v448, 32
      %v2152 = vpop.permute.xlu0 %2151
      %2153 = vrot.lane.b32.xlu0 %v453, 32
      %v2154 = vpop.permute.xlu0 %2153
      %2155 = vrot.lane.b32.xlu0 %v458, 32
      %v2156 = vpop.permute.xlu0 %2155
      %2157 = vrot.lane.b32.xlu0 %v463, 32
      %v2158 = vpop.permute.xlu0 %2157
      %2159 = vrot.lane.b32.xlu0 %v468, 32
      %v2160 = vpop.permute.xlu0 %2159
      %v2170 = vsel %vm579, %v2129, 0
      %v2173 = vsel %vm579, %v2130, 0
      %v2176 = vsel %vm579, %v2131, 0
      %v2179 = vsel %vm579, %v2132, 0
      %2181 = vmatprep.subr.mxu0 0.0
      %2182 = vmatpush1.msra.mxu0 %v2146
      %2183 = vmatprep.subr.mxu0 0.0
      %2184 = vmatpush1.msra.mxu0 %v2148
      %2185 = vmatprep.subr.mxu0 0.0
      %2186 = vmatpush1.msra.mxu0 %v2150
      %2187 = vmatprep.subr.mxu0 0.0
      %2188 = vmatpush1.msra.mxu0 %v2152
      %2189 = vmatprep.subr.mxu0 0.0
      %2190 = vmatpush1.msra.mxu0 %v2154
      %2191 = vmatprep.subr.mxu0 0.0
      %2192 = vmatpush1.msra.mxu0 %v2156
      %2193 = vmatprep.subr.mxu0 0.0
      %2194 = vmatpush1.msra.mxu0 %v2158
      %2195 = vmatprep.subr.mxu0 0.0
      %2196 = vmatpush1.msra.mxu0 %v2160
      %2197 = vmatprep.subr.mxu0 0.0
      %2198 = vmatpush1.msra.mxu0 0.0
      %2199 = vmatprep.subr.mxu0 0.0
      %2200 = vmatpush1.msra.mxu0 0.0
      %2201 = vmatprep.subr.mxu0 0.0
      %2202 = vmatpush1.msra.mxu0 0.0
      %2203 = vmatprep.subr.mxu0 0.0
      %2204 = vmatpush1.msra.mxu0 0.0
      %2205 = vmatprep.subr.mxu0 0.0
      %2206 = vmatpush1.msra.mxu0 0.0
      %2207 = vmatprep.subr.mxu0 0.0
      %2208 = vmatpush1.msra.mxu0 0.0
      %2209 = vmatprep.subr.mxu0 0.0
      %2210 = vmatpush1.msra.mxu0 0.0
      %2211 = vmatprep.subr.mxu0 0.0
      %2212 = vmatpush1.msra.mxu0 0.0
      %2213 = vmatprep.subr.mxu0 0.0
      %2214 = vmatpush1.msra.mxu0 0.0
      %2215 = vmatprep.subr.mxu0 0.0
      %2216 = vmatpush1.msra.mxu0 0.0
      %2217 = vmatprep.subr.mxu0 0.0
      %2218 = vmatpush1.msra.mxu0 0.0
      %2219 = vmatprep.subr.mxu0 0.0
      %2220 = vmatpush1.msra.mxu0 0.0
      %2221 = vmatprep.subr.mxu0 0.0
      %2222 = vmatpush1.msra.mxu0 0.0
      %2223 = vmatprep.subr.mxu0 0.0
      %2224 = vmatpush1.msra.mxu0 0.0
      %2225 = vmatprep.subr.mxu0 0.0
      %2226 = vmatpush1.msra.mxu0 0.0
      %2227 = vmatprep.subr.mxu0 0.0
      %2228 = vmatpush1.msra.mxu0 0.0
      %2229 = vmatprep.subr.mxu0 0.0
      %2230 = vmatpush1.msra.mxu0 0.0
      %2231 = vmatprep.subr.mxu0 0.0
      %2232 = vmatpush1.msra.mxu0 0.0
      %2233 = vmatprep.subr.mxu0 0.0
      %2234 = vmatpush1.msra.mxu0 0.0
      %2235 = vmatprep.subr.mxu0 0.0
      %2236 = vmatpush1.msra.mxu0 0.0
      %2237 = vmatprep.subr.mxu0 0.0
      %2238 = vmatpush1.msra.mxu0 0.0
      %2239 = vmatprep.subr.mxu0 0.0
      %2240 = vmatpush1.msra.mxu0 0.0
      %2241 = vmatprep.subr.mxu0 0.0
      %2242 = vmatpush1.msra.mxu0 0.0
      %2243 = vmatprep.subr.mxu0 0.0
      %2244 = vmatpush1.msra.mxu0 0.0
      %2245 = vmatprep.mubr.f32.mxu0 0.0
      %2246 = vmatmul.mubr.f32.gmra.mrb[0].mxu0 %v2170
      %v2247 = vpop.f32.mrb[0].mxu0
      %v2248 = vadd.f32 0.0, %v2247
      %v2249 = vpop.f32.mrb[0].mxu0
      %2250 = vmatprep.mubr.f32.mxu0 0.0
      %2251 = vmatmul.mubr.f32.gmra.mrb[0].mxu0 %v2173
      %v2252 = vpop.f32.mrb[0].mxu0
      %v2253 = vadd.f32 0.0, %v2252
      %v2254 = vpop.f32.mrb[0].mxu0
      %2255 = vmatprep.mubr.f32.mxu0 0.0
      %2256 = vmatmul.mubr.f32.gmra.mrb[0].mxu0 %v2176
      %v2257 = vpop.f32.mrb[0].mxu0
      %v2258 = vadd.f32 0.0, %v2257
      %v2259 = vpop.f32.mrb[0].mxu0
      %2260 = vmatprep.mubr.f32.mxu0 0.0
      %2261 = vmatmul.mubr.f32.gmra.mrb[0].mxu0 %v2179
      %v2262 = vpop.f32.mrb[0].mxu0
      %v2263 = vadd.f32 0.0, %v2262
      %v2264 = vpop.f32.mrb[0].mxu0
      %2265 = vdwg.mxu0
      %2266 = vrot.lane.b32.xlu0 %v320, 32
      %v2267 = vpop.permute.xlu0 %2266
      %2268 = vrot.lane.b32.xlu0 %v326, 32
      %v2269 = vpop.permute.xlu0 %2268
      %2270 = vrot.lane.b32.xlu0 %v332, 32
      %v2271 = vpop.permute.xlu0 %2270
      %2272 = vrot.lane.b32.xlu0 %v338, 32
      %v2273 = vpop.permute.xlu0 %2272
      %2274 = vrot.lane.b32.xlu0 %v344, 32
      %v2275 = vpop.permute.xlu0 %2274
      %2276 = vrot.lane.b32.xlu0 %v350, 32
      %v2277 = vpop.permute.xlu0 %2276
      %2278 = vrot.lane.b32.xlu0 %v356, 32
      %v2279 = vpop.permute.xlu0 %2278
      %2280 = vrot.lane.b32.xlu0 %v362, 32
      %v2281 = vpop.permute.xlu0 %2280
      %v2282 = vsel %vm471, %v2267, 0
      %v2284 = vsel %vm471, %v2269, 0
      %v2286 = vsel %vm471, %v2271, 0
      %v2288 = vsel %vm471, %v2273, 0
      %v2290 = vsel %vm471, %v2275, 0
      %v2292 = vsel %vm471, %v2277, 0
      %v2294 = vsel %vm471, %v2279, 0
      %v2296 = vsel %vm471, %v2281, 0
      %2298 = vmatprep.subr.mxu0 0.0
      %2299 = vmatpush1.msra.mxu0 %v2248
      %2300 = vmatprep.subr.mxu0 0.0
      %2301 = vmatpush1.msra.mxu0 %v2253
      %2302 = vmatprep.subr.mxu0 0.0
      %2303 = vmatpush1.msra.mxu0 %v2258
      %2304 = vmatprep.subr.mxu0 0.0
      %2305 = vmatpush1.msra.mxu0 %v2263
      %2306 = vmatprep.subr.mxu0 0.0
      %2307 = vmatpush1.msra.mxu0 0.0
      %2308 = vmatprep.subr.mxu0 0.0
      %2309 = vmatpush1.msra.mxu0 0.0
      %2310 = vmatprep.subr.mxu0 0.0
      %2311 = vmatpush1.msra.mxu0 0.0
      %2312 = vmatprep.subr.mxu0 0.0
      %2313 = vmatpush1.msra.mxu0 0.0
      %2314 = vmatprep.subr.mxu0 0.0
      %2315 = vmatpush1.msra.mxu0 0.0
      %2316 = vmatprep.subr.mxu0 0.0
      %2317 = vmatpush1.msra.mxu0 0.0
      %2318 = vmatprep.subr.mxu0 0.0
      %2319 = vmatpush1.msra.mxu0 0.0
      %2320 = vmatprep.subr.mxu0 0.0
      %2321 = vmatpush1.msra.mxu0 0.0
      %2322 = vmatprep.subr.mxu0 0.0
      %2323 = vmatpush1.msra.mxu0 0.0
      %2324 = vmatprep.subr.mxu0 0.0
      %2325 = vmatpush1.msra.mxu0 0.0
      %2326 = vmatprep.subr.mxu0 0.0
      %2327 = vmatpush1.msra.mxu0 0.0
      %2328 = vmatprep.subr.mxu0 0.0
      %2329 = vmatpush1.msra.mxu0 0.0
      %2330 = vmatprep.subr.mxu0 0.0
      %2331 = vmatpush1.msra.mxu0 0.0
      %2332 = vmatprep.subr.mxu0 0.0
      %2333 = vmatpush1.msra.mxu0 0.0
      %2334 = vmatprep.subr.mxu0 0.0
      %2335 = vmatpush1.msra.mxu0 0.0
      %2336 = vmatprep.subr.mxu0 0.0
      %2337 = vmatpush1.msra.mxu0 0.0
      %2338 = vmatprep.subr.mxu0 0.0
      %2339 = vmatpush1.msra.mxu0 0.0
      %2340 = vmatprep.subr.mxu0 0.0
      %2341 = vmatpush1.msra.mxu0 0.0
      %2342 = vmatprep.subr.mxu0 0.0
      %2343 = vmatpush1.msra.mxu0 0.0
      %2344 = vmatprep.subr.mxu0 0.0
      %2345 = vmatpush1.msra.mxu0 0.0
      %2346 = vmatprep.subr.mxu0 0.0
      %2347 = vmatpush1.msra.mxu0 0.0
      %2348 = vmatprep.subr.mxu0 0.0
      %2349 = vmatpush1.msra.mxu0 0.0
      %2350 = vmatprep.subr.mxu0 0.0
      %2351 = vmatpush1.msra.mxu0 0.0
      %2352 = vmatprep.subr.mxu0 0.0
      %2353 = vmatpush1.msra.mxu0 0.0
      %2354 = vmatprep.subr.mxu0 0.0
      %2355 = vmatpush1.msra.mxu0 0.0
      %2356 = vmatprep.subr.mxu0 0.0
      %2357 = vmatpush1.msra.mxu0 0.0
      %2358 = vmatprep.subr.mxu0 0.0
      %2359 = vmatpush1.msra.mxu0 0.0
      %2360 = vmatprep.subr.mxu0 0.0
      %2361 = vmatpush1.msra.mxu0 0.0
      %2362 = vmatprep.mubr.f32.mxu0 0.0
      %2363 = vmatmul.mubr.f32.gmra.mrb[0].mxu0 %v2282
      %v2364 = vpop.f32.mrb[0].mxu0
      %v2365 = vadd.f32 0.0, %v2364
      %v2366 = vpop.f32.mrb[0].mxu0
      %2367 = vmatprep.mubr.f32.mxu0 0.0
      %2368 = vmatmul.mubr.f32.gmra.mrb[0].mxu0 %v2284
      %v2369 = vpop.f32.mrb[0].mxu0
      %v2370 = vadd.f32 0.0, %v2369
      %v2371 = vpop.f32.mrb[0].mxu0
      %2372 = vmatprep.mubr.f32.mxu0 0.0
      %2373 = vmatmul.mubr.f32.gmra.mrb[0].mxu0 %v2286
      %v2374 = vpop.f32.mrb[0].mxu0
      %v2375 = vadd.f32 0.0, %v2374
      %v2376 = vpop.f32.mrb[0].mxu0
      %2377 = vmatprep.mubr.f32.mxu0 0.0
      %2378 = vmatmul.mubr.f32.gmra.mrb[0].mxu0 %v2288
      %v2379 = vpop.f32.mrb[0].mxu0
      %v2380 = vadd.f32 0.0, %v2379
      %v2381 = vpop.f32.mrb[0].mxu0
      %2382 = vmatprep.mubr.f32.mxu0 0.0
      %2383 = vmatmul.mubr.f32.gmra.mrb[0].mxu0 %v2290
      %v2384 = vpop.f32.mrb[0].mxu0
      %v2385 = vadd.f32 0.0, %v2384
      %v2386 = vpop.f32.mrb[0].mxu0
      %2387 = vmatprep.mubr.f32.mxu0 0.0
      %2388 = vmatmul.mubr.f32.gmra.mrb[0].mxu0 %v2292
      %v2389 = vpop.f32.mrb[0].mxu0
      %v2390 = vadd.f32 0.0, %v2389
      %v2391 = vpop.f32.mrb[0].mxu0
      %2392 = vmatprep.mubr.f32.mxu0 0.0
      %2393 = vmatmul.mubr.f32.gmra.mrb[0].mxu0 %v2294
      %v2394 = vpop.f32.mrb[0].mxu0
      %v2395 = vadd.f32 0.0, %v2394
      %v2396 = vpop.f32.mrb[0].mxu0
      %2397 = vmatprep.mubr.f32.mxu0 0.0
      %2398 = vmatmul.mubr.f32.gmra.mrb[0].mxu0 %v2296
      %v2399 = vpop.f32.mrb[0].mxu0
      %v2400 = vadd.f32 0.0, %v2399
      %v2401 = vpop.f32.mrb[0].mxu0
      %2402 = vdwg.mxu0
      %v2404 = vsel %vm471, %v2365, 0
      %v2407 = vsel %vm471, %v2370, 0
      %v2410 = vsel %vm471, %v2375, 0
      %v2413 = vsel %vm471, %v2380, 0
      %v2416 = vsel %vm471, %v2385, 0
      %v2419 = vsel %vm471, %v2390, 0
      %v2422 = vsel %vm471, %v2395, 0
      %v2425 = vsel %vm471, %v2400, 0
      %2427 = vmatprep.subr.mxu0 0.0
      %2428 = vmatpush1.msra.mxu0 %v224
      %2429 = vmatprep.subr.mxu0 0.0
      %2430 = vmatpush1.msra.mxu0 %v225
      %2431 = vmatprep.subr.mxu0 0.0
      %2432 = vmatpush1.msra.mxu0 %v226
      %2433 = vmatprep.subr.mxu0 0.0
      %2434 = vmatpush1.msra.mxu0 %v227
      %2435 = vmatprep.subr.mxu0 0.0
      %2436 = vmatpush1.msra.mxu0 0.0
      %2437 = vmatprep.subr.mxu0 0.0
      %2438 = vmatpush1.msra.mxu0 0.0
      %2439 = vmatprep.subr.mxu0 0.0
      %2440 = vmatpush1.msra.mxu0 0.0
      %2441 = vmatprep.subr.mxu0 0.0
      %2442 = vmatpush1.msra.mxu0 0.0
      %2443 = vmatprep.subr.mxu0 0.0
      %2444 = vmatpush1.msra.mxu0 0.0
      %2445 = vmatprep.subr.mxu0 0.0
      %2446 = vmatpush1.msra.mxu0 0.0
      %2447 = vmatprep.subr.mxu0 0.0
      %2448 = vmatpush1.msra.mxu0 0.0
      %2449 = vmatprep.subr.mxu0 0.0
      %2450 = vmatpush1.msra.mxu0 0.0
      %2451 = vmatprep.subr.mxu0 0.0
      %2452 = vmatpush1.msra.mxu0 0.0
      %2453 = vmatprep.subr.mxu0 0.0
      %2454 = vmatpush1.msra.mxu0 0.0
      %2455 = vmatprep.subr.mxu0 0.0
      %2456 = vmatpush1.msra.mxu0 0.0
      %2457 = vmatprep.subr.mxu0 0.0
      %2458 = vmatpush1.msra.mxu0 0.0
      %2459 = vmatprep.subr.mxu0 0.0
      %2460 = vmatpush1.msra.mxu0 0.0
      %2461 = vmatprep.subr.mxu0 0.0
      %2462 = vmatpush1.msra.mxu0 0.0
      %2463 = vmatprep.subr.mxu0 0.0
      %2464 = vmatpush1.msra.mxu0 0.0
      %2465 = vmatprep.subr.mxu0 0.0
      %2466 = vmatpush1.msra.mxu0 0.0
      %2467 = vmatprep.subr.mxu0 0.0
      %2468 = vmatpush1.msra.mxu0 0.0
      %2469 = vmatprep.subr.mxu0 0.0
      %2470 = vmatpush1.msra.mxu0 0.0
      %2471 = vmatprep.subr.mxu0 0.0
      %2472 = vmatpush1.msra.mxu0 0.0
      %2473 = vmatprep.subr.mxu0 0.0
      %2474 = vmatpush1.msra.mxu0 0.0
      %2475 = vmatprep.subr.mxu0 0.0
      %2476 = vmatpush1.msra.mxu0 0.0
      %2477 = vmatprep.subr.mxu0 0.0
      %2478 = vmatpush1.msra.mxu0 0.0
      %2479 = vmatprep.subr.mxu0 0.0
      %2480 = vmatpush1.msra.mxu0 0.0
      %2481 = vmatprep.subr.mxu0 0.0
      %2482 = vmatpush1.msra.mxu0 0.0
      %2483 = vmatprep.subr.mxu0 0.0
      %2484 = vmatpush1.msra.mxu0 0.0
      %2485 = vmatprep.subr.mxu0 0.0
      %2486 = vmatpush1.msra.mxu0 0.0
      %2487 = vmatprep.subr.mxu0 0.0
      %2488 = vmatpush1.msra.mxu0 0.0
      %2489 = vmatprep.subr.mxu0 0.0
      %2490 = vmatpush1.msra.mxu0 0.0
      %2491 = vmatprep.mubr.f32.mxu0 0.0
      %2492 = vmatmul.mubr.f32.gmra.mrb[0].mxu0 %v2404
      %v2493 = vpop.f32.mrb[0].mxu0
      %v2494 = vadd.f32 0.0, %v2493
      %v2495 = vpop.f32.mrb[0].mxu0
      %2496 = vmatprep.mubr.f32.mxu0 0.0
      %2497 = vmatmul.mubr.f32.gmra.mrb[0].mxu0 %v2407
      %v2498 = vpop.f32.mrb[0].mxu0
      %v2499 = vadd.f32 0.0, %v2498
      %v2500 = vpop.f32.mrb[0].mxu0
      %2501 = vmatprep.mubr.f32.mxu0 0.0
      %2502 = vmatmul.mubr.f32.gmra.mrb[0].mxu0 %v2410
      %v2503 = vpop.f32.mrb[0].mxu0
      %v2504 = vadd.f32 0.0, %v2503
      %v2505 = vpop.f32.mrb[0].mxu0
      %2506 = vmatprep.mubr.f32.mxu0 0.0
      %2507 = vmatmul.mubr.f32.gmra.mrb[0].mxu0 %v2413
      %v2508 = vpop.f32.mrb[0].mxu0
      %v2509 = vadd.f32 0.0, %v2508
      %v2510 = vpop.f32.mrb[0].mxu0
      %2511 = vmatprep.mubr.f32.mxu0 0.0
      %2512 = vmatmul.mubr.f32.gmra.mrb[0].mxu0 %v2416
      %v2513 = vpop.f32.mrb[0].mxu0
      %v2514 = vadd.f32 0.0, %v2513
      %v2515 = vpop.f32.mrb[0].mxu0
      %2516 = vmatprep.mubr.f32.mxu0 0.0
      %2517 = vmatmul.mubr.f32.gmra.mrb[0].mxu0 %v2419
      %v2518 = vpop.f32.mrb[0].mxu0
      %v2519 = vadd.f32 0.0, %v2518
      %v2520 = vpop.f32.mrb[0].mxu0
      %2521 = vmatprep.mubr.f32.mxu0 0.0
      %2522 = vmatmul.mubr.f32.gmra.mrb[0].mxu0 %v2422
      %v2523 = vpop.f32.mrb[0].mxu0
      %v2524 = vadd.f32 0.0, %v2523
      %v2525 = vpop.f32.mrb[0].mxu0
      %2526 = vmatprep.mubr.f32.mxu0 0.0
      %2527 = vmatmul.mubr.f32.gmra.mrb[0].mxu0 %v2425
      %v2528 = vpop.f32.mrb[0].mxu0
      %v2529 = vadd.f32 0.0, %v2528
      %v2530 = vpop.f32.mrb[0].mxu0
      %2531 = vdwg.mxu0
      %v2532 = vadd.f32 %v1997, %v2494
      %v2533 = vadd.f32 %v1998, %v2499
      %v2534 = vadd.f32 %v1999, %v2504
      %v2535 = vadd.f32 %v2000, %v2509
      %v2536 = vadd.f32 %v2001, %v2514
      %v2537 = vadd.f32 %v2002, %v2519
      %v2538 = vadd.f32 %v2003, %v2524
      %v2539 = vadd.f32 %v2004, %v2529
      %v2540 = vld [vmem:[%s3] sm:$0x1]
      %v2542 = vlaneseq
      %v2543 = vshrl.u32 %v2542, 7
      %v2544 = vsub.s32 0, %v2543
      %v2545 = vrot.slane %v2540, %v2544
      %v2547 = vadd.f32 %v2532, %v2545
      %v2548 = vadd.f32 %v2533, %v2545
      %v2549 = vadd.f32 %v2534, %v2545
      %v2550 = vadd.f32 %v2535, %v2545
      %v2551 = vadd.f32 %v2536, %v2545
      %v2552 = vadd.f32 %v2537, %v2545
      %v2553 = vadd.f32 %v2538, %v2545
      %v2554 = vadd.f32 %v2539, %v2545
      %2555 = vst.msk [vmem:[%s197] sm:$0xff] %vm228, %v2547
      %2556 = vst.msk [vmem:[%s197 + $0x8] sm:$0xff] %vm228, %v2548
      %2557 = vst.msk [vmem:[%s197 + $0x10] sm:$0xff] %vm228, %v2549
      %2558 = vst.msk [vmem:[%s197 + $0x18] sm:$0xff] %vm228, %v2550
      %2559 = vst.msk [vmem:[%s197 + $0x20] sm:$0xff] %vm228, %v2551
      %2560 = vst.msk [vmem:[%s197 + $0x28] sm:$0xff] %vm228, %v2552
      %2561 = vst.msk [vmem:[%s197 + $0x30] sm:$0xff] %vm228, %v2553
      %2562 = vst.msk [vmem:[%s197 + $0x38] sm:$0xff] %vm228, %v2554
      %p2563 = scmp.lt.s32.totalorder %s15, 1
      %s2564 = scalar_select %p2563, %s15, 1
      %s2565 = smul.addr %s2564, 8
      %s2566 = smul.addr %s2565, 8
      %s2567 = scalar_lea.vmem %s4, %s2566
      // Predicated region
      $region37: #{tpu_custom_call.1} parent=35 // pred_check
        %p2568 = pneg %p122
      $region38: #{tpu_custom_call.1} parent=35 // pred_check_branch
        %2570 = sbr.rel (%p2568) target = $region40
      $region39: #{tpu_custom_call.1} parent=35 // pred_region
        _
      $region40: #{tpu_custom_call.1} parent=35 // pred_fallthru
        _
    $region36: #{tpu_custom_call.1} parent=5 // pred_fallthru
      _
    %p2571 = scmp.le.s32.totalorder 2, %s10
    // Predicated region
    $region41: #{tpu_custom_call.1} parent=5 // pred_check
      %p2572 = pneg %p2571
    $region42: #{tpu_custom_call.1} parent=5 // pred_check_branch
      %2574 = sbr.rel (%p2572) target = $region44
    $region43: #{tpu_custom_call.1} parent=5 // pred_region
      %s2575 = ssub.s32 %s10, 2
      // Predicated region
      $region45: #{tpu_custom_call.1} parent=43 // pred_check
        %p2576 = pneg %p128
      $region46: #{tpu_custom_call.1} parent=43 // pred_check_branch
        %2578 = sbr.rel (%p2576) target = $region48
      $region47: #{tpu_custom_call.1} parent=43 // pred_region
        %p2579 = scmp.lt.s32.totalorder %s16, 1
        %s2580 = scalar_select %p2579, %s16, 1
        %s2581 = smul.addr %s2580, 8
        %s2582 = smul.addr %s2581, 8
        %s2583 = scalar_lea.vmem %s4, %s2582
      $region48: #{tpu_custom_call.1} parent=43 // pred_fallthru
        _
    $region44: #{tpu_custom_call.1} parent=5 // pred_fallthru
      _
  $region6: #{tpu_custom_call.1} parent=0 // loop_footer
    %s14 = sadd.s32 1, %s10
  $region7: #{tpu_custom_call.1} parent=0 // loop_footer_branch
    %9 = sbr.rel target = $region3
  $region8: #{tpu_custom_call.1} parent=0 // loop_exit
    _

</llo_original>
